<compile_context>
chip_gen: v6e
topology: v6e:2x2x1
jax: 0.10.0
libtpu: 0.0.40
codegen_flags: <defaults>
</compile_context>

<pallas_src>
import functools
import math

import jax
import jax.numpy as jnp
from jax.experimental import pallas as pl
from jax.experimental.pallas import tpu as pltpu

NEG_SLOPE = 0.01     # nn.LeakyReLU default negative slope
BN_EPS = 1e-5


def _ru(x, m):
    return (x + m - 1) // m * m


# ----------------------------------------------------------------------------
# Pallas kernel 1: K-tiled, batched GEMM
#   out[g] = act(A[g] @ B[g] + bias[g])   (bf16 operands, f32 accumulation)
# ----------------------------------------------------------------------------
def _gemm_kernel(*refs, act, has_bias, has_slope, use_scratch):
    it = iter(refs)
    a_ref = next(it)                                  # (TM, TK) bf16
    b_ref = next(it)                                  # (TK, TN) bf16
    bias_ref = next(it) if has_bias else None         # (1, TN) f32
    slope_ref = next(it) if has_slope else None       # (1, TN) f32
    o_ref = next(it)                                  # (TM, TN) out dtype
    acc_ref = next(it) if use_scratch else o_ref      # f32 accumulator

    k = pl.program_id(3)

    @pl.when(k == 0)
    def _():
        acc_ref[...] = jnp.zeros_like(acc_ref)

    acc_ref[...] += jnp.dot(a_ref[...], b_ref[...],
                            preferred_element_type=jnp.float32)

    @pl.when(k == pl.num_programs(3) - 1)
    def _():
        acc = acc_ref[...]
        if has_bias:
            acc = acc + bias_ref[...]
        if act == "lrelu":
            acc = jnp.where(acc >= 0, acc, NEG_SLOPE * acc)
        elif act == "prelu":
            acc = jnp.where(acc >= 0, acc, slope_ref[...] * acc)
        o_ref[...] = acc.astype(o_ref.dtype)


def _gemm_dims(M, K, N):
    """Padded sizes and tile sizes for the GEMM grid (tiles capped at 512)."""
    Kp = _ru(K, 128)
    Np = _ru(N, 128)
    if M >= 512:
        TM, Mp = 512, _ru(M, 512)
    elif M >= 256:
        TM, Mp = 256, _ru(M, 256)
    else:
        Mp = _ru(M, 8)
        TM = Mp
    if Np <= 512:
        TN = Np                       # single N tile: A streamed from HBM once
    elif Np % 512 == 0:
        TN = 512
    elif Np % 256 == 0:
        TN = 256
    else:
        TN = 128
    TK = 128
    for t in (512, 384, 256, 128):
        if Kp % t == 0:
            TK = t
            break
    return Mp, Kp, Np, TM, TN, TK


@functools.lru_cache(maxsize=None)
def _get_gemm(G, Mp, Kp, Np, TM, TN, TK, act, has_bias, out_dtype_name):
    has_slope = act == "prelu"
    out_dtype = jnp.dtype(out_dtype_name)
    use_scratch = out_dtype != jnp.float32   # f32 output: accumulate directly in o_ref
    in_specs = [
        pl.BlockSpec((None, TM, TK), lambda g, i, j, k: (g, i, k)),
        pl.BlockSpec((None, TK, TN), lambda g, i, j, k: (g, k, j)),
    ]
    if has_bias:
        in_specs.append(pl.BlockSpec((None, 1, TN), lambda g, i, j, k: (g, 0, j)))
    if has_slope:
        in_specs.append(pl.BlockSpec((None, 1, TN), lambda g, i, j, k: (g, 0, j)))
    fn = pl.pallas_call(
        functools.partial(_gemm_kernel, act=act, has_bias=has_bias,
                          has_slope=has_slope, use_scratch=use_scratch),
        out_shape=jax.ShapeDtypeStruct((G, Mp, Np), out_dtype),
        grid_spec=pltpu.PrefetchScalarGridSpec(
            num_scalar_prefetch=0,
            grid=(G, Mp // TM, Np // TN, Kp // TK),
            in_specs=in_specs,
            out_specs=pl.BlockSpec((None, TM, TN), lambda g, i, j, k: (g, i, j)),
            scratch_shapes=([pltpu.VMEM((TM, TN), jnp.float32)]
                            if use_scratch else []),
        ),
        compiler_params=pltpu.CompilerParams(
            dimension_semantics=("parallel", "parallel", "parallel", "arbitrary"),
            vmem_limit_bytes=48 * 1024 * 1024,
        ),
    )
    return jax.jit(fn)


def batched_matmul_act(a, b, bias=None, slope=None, act="none",
                       out_dtype=jnp.bfloat16):
    """a: (G, M, K), b: (G, K, N) -> act(a @ b + bias): (G, M, N)."""
    G, M, K = a.shape
    _, _, N = b.shape
    Mp, Kp, Np, TM, TN, TK = _gemm_dims(M, K, N)
    a_p = a.astype(jnp.bfloat16)
    if (Mp, Kp) != (M, K):
        a_p = jnp.pad(a_p, ((0, 0), (0, Mp - M), (0, Kp - K)))
    b_p = b.astype(jnp.bfloat16)
    if (Kp, Np) != (K, N):
        b_p = jnp.pad(b_p, ((0, 0), (0, Kp - K), (0, Np - N)))
    args = [a_p, b_p]
    has_bias = bias is not None
    if has_bias:
        bias_p = jnp.zeros((G, 1, Np), jnp.float32).at[:, 0, :N].set(
            bias.astype(jnp.float32))
        args.append(bias_p)
    if act == "prelu":
        sl = slope if slope is not None else jnp.zeros((G, N), jnp.float32)
        slope_p = jnp.zeros((G, 1, Np), jnp.float32).at[:, 0, :N].set(
            sl.astype(jnp.float32))
        args.append(slope_p)
    out = _get_gemm(G, Mp, Kp, Np, TM, TN, TK, act, has_bias,
                    jnp.dtype(out_dtype).name)(*args)
    if (Mp, Np) != (M, N):
        out = out[:, :M, :N]
    return out


def matmul_act(a, b, bias=None, slope=None, act="none", out_dtype=jnp.bfloat16):
    """2-D convenience wrapper: act((M,K) @ (K,N) + bias)."""
    bias3 = None if bias is None else bias[None]
    slope3 = None if slope is None else slope[None]
    return batched_matmul_act(a[None], b[None], bias3, slope3, act, out_dtype)[0]


# ----------------------------------------------------------------------------
# Pallas kernel 2: per-channel scale/shift + PReLU (input layer BN+PReLU only)
# ----------------------------------------------------------------------------
def _scale_shift_kernel(x_ref, scale_ref, shift_ref, slope_ref, o_ref):
    y = x_ref[...].astype(jnp.float32) * scale_ref[...] + shift_ref[...]
    y = jnp.where(y >= 0, y, slope_ref[...] * y)
    o_ref[...] = y.astype(o_ref.dtype)


@functools.lru_cache(maxsize=None)
def _get_scale_shift(Mp, C, TM):
    fn = pl.pallas_call(
        _scale_shift_kernel,
        out_shape=jax.ShapeDtypeStruct((Mp, C), jnp.bfloat16),
        grid_spec=pltpu.PrefetchScalarGridSpec(
            num_scalar_prefetch=0,
            grid=(Mp // TM,),
            in_specs=[pl.BlockSpec((TM, C), lambda i: (i, 0)),
                      pl.BlockSpec((1, C), lambda i: (0, 0)),
                      pl.BlockSpec((1, C), lambda i: (0, 0)),
                      pl.BlockSpec((1, C), lambda i: (0, 0))],
            out_specs=pl.BlockSpec((TM, C), lambda i: (i, 0)),
        ),
        compiler_params=pltpu.CompilerParams(dimension_semantics=("parallel",)),
    )
    return jax.jit(fn)


# ----------------------------------------------------------------------------
# Pallas kernel 3: fused BN2 + SE gating + shortcut-BN + residual add
#   out = res * a[n,c] + b[n,c] + shortcut * sc_s[c] + sc_t[c]
# ----------------------------------------------------------------------------
def _residual_kernel(x_ref, a_ref, b_ref, r_ref, c_ref, d_ref, o_ref):
    y = (x_ref[...].astype(jnp.float32) * a_ref[...] + b_ref[...]
         + r_ref[...].astype(jnp.float32) * c_ref[...] + d_ref[...])
    o_ref[...] = y.astype(o_ref.dtype)


@functools.lru_cache(maxsize=None)
def _get_residual(N, HWp, TR, C):
    fn = pl.pallas_call(
        _residual_kernel,
        out_shape=jax.ShapeDtypeStruct((N, HWp, C), jnp.bfloat16),
        grid_spec=pltpu.PrefetchScalarGridSpec(
            num_scalar_prefetch=0,
            grid=(N, HWp // TR),
            in_specs=[
                pl.BlockSpec((None, TR, C), lambda n, i: (n, i, 0)),
                pl.BlockSpec((None, 1, C), lambda n, i: (n, 0, 0)),
                pl.BlockSpec((None, 1, C), lambda n, i: (n, 0, 0)),
                pl.BlockSpec((None, TR, C), lambda n, i: (n, i, 0)),
                pl.BlockSpec((None, 1, C), lambda n, i: (0, 0, 0)),
                pl.BlockSpec((None, 1, C), lambda n, i: (0, 0, 0)),
            ],
            out_specs=pl.BlockSpec((None, TR, C), lambda n, i: (n, i, 0)),
        ),
        compiler_params=pltpu.CompilerParams(
            dimension_semantics=("parallel", "parallel")),
    )
    return jax.jit(fn)


def _row_tiles(M, cap=512):
    for t in (cap, 256, 128):
        if M >= t and M % t == 0:
            return M, t
    if M > cap:
        return _ru(M, 256), 256
    Mp = _ru(M, 8)
    return Mp, Mp


def fused_se_residual(res, a_nc, b_nc, shortcut, sc_scale, sc_shift):
    """out = res * a[n,c] + b[n,c] + shortcut * sc_scale[c] + sc_shift[c]  (NHWC, bf16)."""
    N, H, W, C = res.shape
    HW = H * W
    HWp, TR = _row_tiles(HW)
    x2 = res.reshape(N, HW, C).astype(jnp.bfloat16)
    r2 = shortcut.reshape(N, HW, C).astype(jnp.bfloat16)
    if HWp != HW:
        x2 = jnp.pad(x2, ((0, 0), (0, HWp - HW), (0, 0)))
        r2 = jnp.pad(r2, ((0, 0), (0, HWp - HW), (0, 0)))
    out = _get_residual(N, HWp, TR, C)(
        x2,
        a_nc.astype(jnp.float32)[:, None, :],
        b_nc.astype(jnp.float32)[:, None, :],
        r2,
        sc_scale.astype(jnp.float32)[None, None, :],
        sc_shift.astype(jnp.float32)[None, None, :])
    if HWp != HW:
        out = out[:, :HW, :]
    return out.reshape(N, H, W, C)


# ----------------------------------------------------------------------------
# NN building blocks (glue in plain JAX, compute in the kernels above)
# ----------------------------------------------------------------------------
def conv2d(x, w, b=None, stride=1, pad=0, act="none", slope=None,
           pre_scale=None, pre_shift=None, out_dtype=jnp.bfloat16):
    """x: NHWC.  w: PyTorch layout (Cout, Cin, KH, KW).
    pre_scale/pre_shift: optional per-input-channel affine applied to x BEFORE the
    zero padding (folds a preceding BatchNorm into the patch build, exactly)."""
    N, H, W, Cin = x.shape
    Cout, _, KH, KW = w.shape
    x = x.astype(jnp.bfloat16)
    if pre_scale is not None:
        x = x * pre_scale.astype(jnp.bfloat16) + pre_shift.astype(jnp.bfloat16)
    Ho = (H + 2 * pad - KH) // stride + 1
    Wo = (W + 2 * pad - KW) // stride + 1
    K = KH * KW * Cin
    Kp = _ru(K, 128)
    if KH == 1 and KW == 1 and stride == 1 and pad == 0:
        patches = x.reshape(N * Ho * Wo, Cin)
        if Kp > K:
            patches = jnp.pad(patches, ((0, 0), (0, Kp - K)))
    else:
        # TODO(synk): im2col still materialized explicitly (no implicit-im2col yet).
        xp = jnp.pad(x, ((0, 0), (pad, pad), (pad, pad), (0, 0))) if pad else x
        cols = []
        for ki in range(KH):
            for kj in range(KW):
                cols.append(xp[:, ki:ki + (Ho - 1) * stride + 1:stride,
                                  kj:kj + (Wo - 1) * stride + 1:stride, :])
        if Kp > K:   # lane-align K inside the concat instead of a full jnp.pad copy
            cols.append(jnp.zeros((N, Ho, Wo, Kp - K), jnp.bfloat16))
        patches = jnp.concatenate(cols, axis=-1).reshape(N * Ho * Wo, Kp)
    wmat = jnp.transpose(w, (2, 3, 1, 0)).reshape(K, Cout)
    if Kp > K:
        wmat = jnp.pad(wmat, ((0, Kp - K), (0, 0)))
    out = matmul_act(patches, wmat, bias=b, slope=slope, act=act,
                     out_dtype=out_dtype)
    return out.reshape(N, Ho, Wo, Cout)


def conv2d_grouped(x, w, b, stride=2, pad=1, act="lrelu", out_dtype=jnp.bfloat16):
    """Per-group conv with a leading group axis.
    x: (G,N,H,W,Cin), w: (G,Cout,Cin,KH,KW), b: (G,Cout)."""
    G, N, H, W, Cin = x.shape
    _, Cout, _, KH, KW = w.shape
    x = x.astype(jnp.bfloat16)
    xp = jnp.pad(x, ((0, 0), (0, 0), (pad, pad), (pad, pad), (0, 0))) if pad else x
    Ho = (H + 2 * pad - KH) // stride + 1
    Wo = (W + 2 * pad - KW) // stride + 1
    K = KH * KW * Cin
    Kp = _ru(K, 128)
    cols = []
    for ki in range(KH):
        for kj in range(KW):
            cols.append(xp[:, :, ki:ki + (Ho - 1) * stride + 1:stride,
                                 kj:kj + (Wo - 1) * stride + 1:stride, :])
    if Kp > K:
        cols.append(jnp.zeros((G, N, Ho, Wo, Kp - K), jnp.bfloat16))
    patches = jnp.concatenate(cols, axis=-1).reshape(G, N * Ho * Wo, Kp)
    wmat = jnp.transpose(w, (0, 3, 4, 2, 1)).reshape(G, K, Cout)
    if Kp > K:
        wmat = jnp.pad(wmat, ((0, 0), (0, Kp - K), (0, 0)))
    out = batched_matmul_act(patches, wmat, bias=b, act=act, out_dtype=out_dtype)
    return out.reshape(G, N, Ho, Wo, Cout)


def _bn_stats(x):
    """Biased batch statistics per channel over (N, H, W) — single pass."""
    # TODO(synk): BN statistics remain a plain-XLA reduction (one read of the activation).
    xf = x.reshape(-1, x.shape[-1]).astype(jnp.float32)
    m = jnp.mean(xf, axis=0)
    v = jnp.maximum(jnp.mean(jnp.square(xf), axis=0) - m * m, 0.0)
    return m, v


def bn_prelu(x, gamma, beta, slope):
    """Training-mode BatchNorm2d (batch statistics) + PReLU, bf16 in/out (input layer)."""
    N, H, W, C = x.shape
    mean, var = _bn_stats(x)
    scale = gamma / jnp.sqrt(var + BN_EPS)
    shift = beta - mean * scale
    M = N * H * W
    Mp, TM = _row_tiles(M)
    x2 = x.reshape(M, C).astype(jnp.bfloat16)
    if Mp != M:
        x2 = jnp.pad(x2, ((0, Mp - M), (0, 0)))
    out = _get_scale_shift(Mp, C, TM)(
        x2, scale[None].astype(jnp.float32), shift[None].astype(jnp.float32),
        slope[None].astype(jnp.float32))
    return out[:M].reshape(N, H, W, C)


def bottleneck_ir_se(x, u):
    in_c, depth, stride = u["in_c"], u["depth"], u["stride"]
    N = x.shape[0]

    # ---- shortcut path ----
    if in_c == depth:
        shortcut = x[:, ::stride, ::stride, :] if stride > 1 else x   # MaxPool2d(1, stride)
        sc_scale = jnp.ones((depth,), jnp.float32)
        sc_shift = jnp.zeros((depth,), jnp.float32)
    else:
        shortcut = conv2d(x, u["sc_w"], None, stride=stride, pad=0, act="none")
        m, v = _bn_stats(shortcut)
        sc_scale = u["sc_g"] / jnp.sqrt(v + BN_EPS)
        sc_shift = u["sc_b"] - m * sc_scale

    # ---- residual path ----
    # BatchNorm2d(in_c): folded into conv1's patch build (exact w.r.t. zero padding)
    m1, v1 = _bn_stats(x)
    s1 = u["bn1_g"] / jnp.sqrt(v1 + BN_EPS)
    t1 = u["bn1_b"] - m1 * s1
    res = conv2d(x, u["conv1_w"], None, stride=1, pad=1, act="prelu",
                 slope=u["prelu"], pre_scale=s1, pre_shift=t1)
    res = conv2d(res, u["conv2_w"], None, stride=stride, pad=1, act="none")

    # BatchNorm2d(depth) statistics + SE gate (pool derived from the same means)
    m_n = jnp.mean(res.reshape(N, -1, depth).astype(jnp.float32), axis=1)   # (N, C)
    msq = jnp.mean(jnp.square(res.reshape(-1, depth).astype(jnp.float32)), axis=0)
    m2 = jnp.mean(m_n, axis=0)
    v2 = jnp.maximum(msq - m2 * m2, 0.0)
    s2 = u["bn2_g"] / jnp.sqrt(v2 + BN_EPS)
    t2 = u["bn2_b"] - m2 * s2
    pooled = m_n * s2[None, :] + t2[None, :]                 # avg-pool of BN2(res)
    # TODO(synk): tiny SE FC gate left to XLA (batch x C) instead of a Pallas launch.
    fc1 = u["se1_w"].reshape(depth // 16, depth)
    fc2 = u["se2_w"].reshape(depth, depth // 16)
    gate = jax.nn.sigmoid(jnp.maximum(pooled @ fc1.T, 0.0) @ fc2.T)          # (N, C)

    # out = BN2(res) * gate + BN_sc(shortcut), fused in one Pallas pass
    return fused_se_residual(res, s2[None, :] * gate, t2[None, :] * gate,
                             shortcut, sc_scale, sc_shift)


def gradual_style_blocks(x, block_params):
    """Run G GradualStyleBlocks sharing the same input, batched along a group axis."""
    G = len(block_params)
    N = x.shape[0]
    C = block_params[0]["lin_w"].shape[0]
    n_convs = len(block_params[0]["convs"])
    # First conv: shared input -> stack the G weight sets along Cout, one fused conv.
    w0 = jnp.concatenate([p["convs"][0][0] for p in block_params], axis=0)
    b0 = jnp.concatenate([p["convs"][0][1] for p in block_params], axis=0)
    h = conv2d(x, w0, b0, stride=2, pad=1, act="lrelu")          # (N, Ho, Wo, G*C)
    Ho, Wo = h.shape[1], h.shape[2]
    h = h.reshape(N, Ho, Wo, G, C).transpose(3, 0, 1, 2, 4)      # (G, N, Ho, Wo, C)
    # Remaining convs: per-block weights, batched GEMM with leading group axis.
    for ci in range(1, n_convs):
        ws = jnp.stack([p["convs"][ci][0] for p in block_params], axis=0)
        bs = jnp.stack([p["convs"][ci][1] for p in block_params], axis=0)
        h = conv2d_grouped(h, ws, bs, stride=2, pad=1, act="lrelu")
    Gh, Nh, Hh, Wh, Ch = h.shape
    h2 = h.reshape(G, Nh * Hh * Wh, Ch)                          # view(-1, out_c) per block
    lw = jnp.stack([p["lin_w"].T for p in block_params], axis=0)  # (G, C, C)
    lb = jnp.stack([p["lin_b"] for p in block_params], axis=0)    # (G, C)
    # Linear + LeakyReLU (the spec's GradualStyleBlock applies LeakyReLU after linear).
    return batched_matmul_act(h2, lw, bias=lb, act="lrelu", out_dtype=jnp.float32)


def _interp_matrix(so, si):
    if so == 1:
        return jnp.zeros((1, si), jnp.float32).at[0, 0].set(1.0)
    src = jnp.arange(so, dtype=jnp.float32) * (si - 1) / (so - 1)
    i0 = jnp.clip(jnp.floor(src).astype(jnp.int32), 0, si - 1)
    i1 = jnp.clip(i0 + 1, 0, si - 1)
    w1 = src - i0.astype(jnp.float32)
    return (jax.nn.one_hot(i0, si, dtype=jnp.float32) * (1.0 - w1)[:, None]
            + jax.nn.one_hot(i1, si, dtype=jnp.float32) * w1[:, None])


def upsample_add(x, y):
    """F.interpolate(x, size=y.shape[1:3], mode='bilinear', align_corners=True) + y."""
    # TODO(synk): bilinear align_corners upsample remains small plain-JAX glue.
    _, H, W, _ = x.shape
    _, Ho, Wo, _ = y.shape
    Ah = _interp_matrix(Ho, H)
    Aw = _interp_matrix(Wo, W)
    xr = jnp.einsum('oh,nhwc->nowc', Ah, x.astype(jnp.float32))
    xr = jnp.einsum('pw,nowc->nopc', Aw, xr)
    return (xr + y.astype(jnp.float32)).astype(jnp.bfloat16)


# ----------------------------------------------------------------------------
# Parameters (deterministic synthetic init; shapes exactly as the PyTorch module)
# ----------------------------------------------------------------------------
def _ir50_units():
    cfg = []
    for (in_c, depth, n) in [(64, 64, 3), (64, 128, 4), (128, 256, 14), (256, 512, 3)]:
        cfg.append((in_c, depth, 2))
        for _ in range(n - 1):
            cfg.append((depth, depth, 1))
    return cfg  # 24 bottleneck_IR_SE units


def init_params(key):
    keys = iter(jax.random.split(key, 2048))

    def w_init(shape, fan_in):
        return jax.random.normal(next(keys), shape, jnp.float32) / math.sqrt(fan_in)

    def b_init(shape):
        return jax.random.normal(next(keys), shape, jnp.float32) * 0.01

    params = {
        "in_conv_w": w_init((64, 3, 3, 3), 3 * 9),
        "in_bn_g": jnp.ones((64,), jnp.float32),
        "in_bn_b": jnp.zeros((64,), jnp.float32),
        "in_prelu": jnp.full((64,), 0.25, jnp.float32),
    }

    body = []
    for (in_c, depth, stride) in _ir50_units():
        u = {"in_c": in_c, "depth": depth, "stride": stride,
             "bn1_g": jnp.ones((in_c,), jnp.float32),
             "bn1_b": jnp.zeros((in_c,), jnp.float32),
             "conv1_w": w_init((depth, in_c, 3, 3), in_c * 9),
             "prelu": jnp.full((depth,), 0.25, jnp.float32),
             "conv2_w": w_init((depth, depth, 3, 3), depth * 9),
             "bn2_g": jnp.ones((depth,), jnp.float32),
             "bn2_b": jnp.zeros((depth,), jnp.float32),
             "se1_w": w_init((depth // 16, depth, 1, 1), depth),
             "se2_w": w_init((depth, depth // 16, 1, 1), depth // 16)}
        if in_c != depth:
            u["sc_w"] = w_init((depth, in_c, 1, 1), in_c)
            u["sc_g"] = jnp.ones((depth,), jnp.float32)
            u["sc_b"] = jnp.zeros((depth,), jnp.float32)
        body.append(u)
    params["body"] = body

    styles = []
    spatials = [16] * 3 + [32] * 4 + [64] * 9       # coarse / middle / fine
    for sp in spatials:
        num_pools = int(math.log2(sp))
        convs = [(w_init((512, 512, 3, 3), 512 * 9), b_init((512,)))
                 for _ in range(num_pools)]
        styles.append({"convs": convs,
                       "lin_w": w_init((512, 512), 512),
                       "lin_b": b_init((512,))})
    params["styles"] = styles

    params["lat1_w"] = w_init((512, 256, 1, 1), 256)
    params["lat1_b"] = b_init((512,))
    params["lat2_w"] = w_init((512, 128, 1, 1), 128)
    params["lat2_b"] = b_init((512,))
    return params


# ----------------------------------------------------------------------------
# Forward pass (mirrors GradualStyleEncoder.forward)
# ----------------------------------------------------------------------------
def gradual_style_encoder_forward(params, x_nchw):
    x = jnp.transpose(x_nchw.astype(jnp.float32), (0, 2, 3, 1))   # NCHW -> NHWC
    # input_layer: Conv(3->64,3x3,s1,p1,no bias) + BN + PReLU
    x = conv2d(x, params["in_conv_w"], None, stride=1, pad=1, act="none")
    x = bn_prelu(x, params["in_bn_g"], params["in_bn_b"], params["in_prelu"])
    c1 = c2 = c3 = None
    for i, u in enumerate(params["body"]):
        x = bottleneck_ir_se(x, u)
        if i == 6:
            c1 = x
        elif i == 20:
            c2 = x
        elif i == 23:
            c3 = x

    lat_coarse = gradual_style_blocks(c3, params["styles"][0:3])   # (3, N, 512)
    p2 = upsample_add(c3, conv2d(c2, params["lat1_w"], params["lat1_b"], 1, 0, "none"))
    lat_middle = gradual_style_blocks(p2, params["styles"][3:7])   # (4, N, 512)
    p1 = upsample_add(p2, conv2d(c1, params["lat2_w"], params["lat2_b"], 1, 0, "none"))
    lat_fine = gradual_style_blocks(p1, params["styles"][7:16])    # (9, N, 512)

    latents = jnp.concatenate(
        [jnp.transpose(l, (1, 0, 2)) for l in (lat_coarse, lat_middle, lat_fine)],
        axis=1)
    return latents                                                 # (N, 16, 512)


if __name__ == "__main__":
    key = jax.random.PRNGKey(0)
    pkey, xkey = jax.random.split(key)
    params = init_params(pkey)
    # Small input consistent with the module (NCHW, 3 channels). The full pSp
    # uses 256x256; 64x64 keeps this synthetic run small — c1/c2/c3 come out
    # 16/8/4 spatial and every GradualStyleBlock still reduces to 1x1.
    x = jax.random.normal(xkey, (2, 3, 64, 64), jnp.float32)
    out = gradual_style_encoder_forward(params, x)
    out = jax.block_until_ready(out)
    assert out.shape == (2, 16, 512), out.shape
    assert out.dtype == jnp.float32
    print("KERNEL_OK")
</pallas_src>

<mosaic_0001>
module attributes {stable_mosaic.version = 11 : i64} {
  func.func @_gemm_kernel(%arg0: i32, %arg1: i32, %arg2: i32, %arg3: i32, %arg4: memref<1x512x128xbf16, #tpu.memory_space<vmem>>, %arg5: memref<1x128x128xbf16, #tpu.memory_space<vmem>>, %arg6: memref<1x512x128xbf16, #tpu.memory_space<vmem>>, %arg7: memref<512x128xf32, #tpu.memory_space<vmem>>) attributes {dimension_semantics = [#tpu.dimension_semantics<parallel>, #tpu.dimension_semantics<parallel>, #tpu.dimension_semantics<parallel>, #tpu.dimension_semantics<arbitrary>], iteration_bounds = array<i64: 1, 16, 1, 1>, scalar_prefetch = 0 : i64, scratch_operands = 1 : i64, tpu.core_type = #tpu.core_type<tc>, window_params = [{transform_indices = @transform_0, window_bounds = array<i64: 1, 512, 128>}, {transform_indices = @transform_1, window_bounds = array<i64: 1, 128, 128>}, {transform_indices = @transform_2, window_bounds = array<i64: 1, 512, 128>}]} {
    %c0_i32 = arith.constant 0 : i32
    %0 = arith.cmpi eq, %arg3, %c0_i32 : i32
    %1 = arith.extui %0 : i1 to i32
    %c0_i32_0 = arith.constant 0 : i32
    %2 = arith.cmpi ne, %1, %c0_i32_0 : i32
    scf.if %2 {
      %cst_12 = arith.constant 0.000000e+00 : f32
      %14 = vector.broadcast %cst_12 : f32 to vector<512x128xf32>
      %c0_13 = arith.constant 0 : index
      %c0_14 = arith.constant 0 : index
      %15 = vector.load %arg7[%c0_13, %c0_14] : memref<512x128xf32, #tpu.memory_space<vmem>>, vector<512x128xf32>
      tpu.vector_store %arg7[%c0_13, %c0_14], %14 {strides = array<i32>} : memref<512x128xf32, #tpu.memory_space<vmem>>, vector<512x128xf32>,
    } else {
    }
    %c0 = arith.constant 0 : index
    %c0_1 = arith.constant 0 : index
    %3 = vector.load %arg7[%c0, %c0_1] : memref<512x128xf32, #tpu.memory_space<vmem>>, vector<512x128xf32>
    %c0_2 = arith.constant 0 : index
    %c0_3 = arith.constant 0 : index
    %c0_4 = arith.constant 0 : index
    %4 = vector.load %arg4[%c0_2, %c0_3, %c0_4] : memref<1x512x128xbf16, #tpu.memory_space<vmem>>, vector<1x512x128xbf16>
    %5 = vector.shape_cast %4 : vector<1x512x128xbf16> to vector<512x128xbf16>
    %c0_5 = arith.constant 0 : index
    %c0_6 = arith.constant 0 : index
    %c0_7 = arith.constant 0 : index
    %6 = vector.load %arg5[%c0_5, %c0_6, %c0_7] : memref<1x128x128xbf16, #tpu.memory_space<vmem>>, vector<1x128x128xbf16>
    %7 = vector.shape_cast %6 : vector<1x128x128xbf16> to vector<128x128xbf16>
    %cst = arith.constant dense<0.000000e+00> : vector<512x128xf32>
    %8 = tpu.matmul %5, %7, %cst {dimension_numbers = #tpu.dot_dimension_numbers<[1], [0], [0], [1], [0, 0, 1, 1], [], []>} : vector<512x128xbf16>, vector<128x128xbf16>, vector<512x128xf32> -> vector<512x128xf32>
    %9 = arith.addf %3, %8 : vector<512x128xf32>
    %c0_8 = arith.constant 0 : index
    %c0_9 = arith.constant 0 : index
    %10 = vector.load %arg7[%c0_8, %c0_9] : memref<512x128xf32, #tpu.memory_space<vmem>>, vector<512x128xf32>
    tpu.vector_store %arg7[%c0_8, %c0_9], %9 {strides = array<i32>} : memref<512x128xf32, #tpu.memory_space<vmem>>, vector<512x128xf32>,
    %c0_i32_10 = arith.constant 0 : i32
    %11 = arith.cmpi eq, %arg3, %c0_i32_10 : i32
    %12 = arith.extui %11 : i1 to i32
    %c0_i32_11 = arith.constant 0 : i32
    %13 = arith.cmpi ne, %12, %c0_i32_11 : i32
    scf.if %13 {
      %c0_12 = arith.constant 0 : index
      %c0_13 = arith.constant 0 : index
      %14 = vector.load %arg7[%c0_12, %c0_13] : memref<512x128xf32, #tpu.memory_space<vmem>>, vector<512x128xf32>
      %15 = arith.truncf %14 : vector<512x128xf32> to vector<512x128xbf16>
      %c0_14 = arith.constant 0 : index
      %c0_15 = arith.constant 0 : index
      %c0_16 = arith.constant 0 : index
      %16 = vector.load %arg6[%c0_14, %c0_15, %c0_16] : memref<1x512x128xbf16, #tpu.memory_space<vmem>>, vector<1x512x128xbf16>
      %17 = vector.shape_cast %16 : vector<1x512x128xbf16> to vector<512x128xbf16>
      %18 = vector.shape_cast %15 : vector<512x128xbf16> to vector<1x512x128xbf16>
      tpu.vector_store %arg6[%c0_14, %c0_15, %c0_16], %18 {strides = array<i32>} : memref<1x512x128xbf16, #tpu.memory_space<vmem>>, vector<1x512x128xbf16>,
    } else {
    }
    return
  }
  func.func @transform_0(%arg0: i32, %arg1: i32, %arg2: i32, %arg3: i32) -> (i32, i32, i32) {
    %c0_i32 = arith.constant 0 : i32
    return %arg0, %arg1, %arg3 : i32, i32, i32
  }
  func.func @transform_1(%arg0: i32, %arg1: i32, %arg2: i32, %arg3: i32) -> (i32, i32, i32) {
    %c0_i32 = arith.constant 0 : i32
    return %arg0, %arg3, %arg2 : i32, i32, i32
  }
  func.func @transform_2(%arg0: i32, %arg1: i32, %arg2: i32, %arg3: i32) -> (i32, i32, i32) {
    %c0_i32 = arith.constant 0 : i32
    return %arg0, %arg1, %arg2 : i32, i32, i32
  }
}

</mosaic_0001>

<llo_original>
// kernel: tpu_custom_call.1
$region0: #{tpu_custom_call.1}
  #allocation0 [shape = 'u32[]', space=smem, size = 0x4, offset = 0x4, fixed_abs, tag = 'smem constant byte address 0x4 - core index']
  #allocation1 [shape = 'u32[144,128]{1,0:T(1,128)}', space=vmem, size = 0x12000, scoped, tag = 'internal scratch']
  #allocation2 [shape = 'f32[512,128]{1,0:T(8,128)}', space=vmem, size = 0x40000, scoped, tag = 'scratch operand']
  %s0 = inlined_call_operand.hbm [shape: bf16[1,8192,128], index: 0, kind: input, shape index: {}]
  %s1 = inlined_call_operand.hbm [shape: bf16[1,128,128], index: 1, kind: input, shape index: {}]
  %s2 = inlined_call_operand.hbm [shape: bf16[1,8192,128], index: 2, kind: output, shape index: {}]
  %s3 = sld [smem:[#allocation0]]
  $region57: #{tpu_custom_call.1} parent=0
    _
  %s5 = ssub.s32 1, %s3
  %s6 = scalar_select 0, %s5, %s3
  $region1: #{tpu_custom_call.1} parent=0
    #allocation3 [shape = 'u8[262144]{0}', space=vmem, size = 0x40000, scoped, tag = 'input window, operand 0']
    #allocation4 [shape = 's32[2]{0}', space=sflag, size = 0x8, scoped, tag = 'scoped memory for tpu_custom_call.1']
    #allocation5 [shape = 's32[2]{0}', space=sflag, size = 0x8, scoped, tag = 'scoped memory for tpu_custom_call.1']
    #allocation6 [shape = 'u8[32768]{0}', space=vmem, size = 0x8000, scoped, tag = 'input window, operand 1, single buffered']
    #allocation7 [shape = 's32[1]{0}', space=sflag, size = 0x4, scoped, tag = 'scoped memory for tpu_custom_call.1']
    #allocation8 [shape = 'u8[262144]{0}', space=vmem, size = 0x40000, scoped, tag = 'output window, operand 0']
    %7 = vsyncpa [#allocation4], 0
    %s8 = scalar_lea.sflag [#allocation4], 1
    %9 = vsyncpa %s8, 0
    %10 = vsyncpa [#allocation7], 0
    %11 = vsyncpa [#allocation5], 0
    %s12 = scalar_lea.sflag [#allocation5], 1
    %13 = vsyncpa %s12, 0
    loop: start=0, step=1, limit=18
    $region2: #{tpu_custom_call.1} parent=1 // loop_pre_header
      _
    $region3: #{tpu_custom_call.1} parent=1 // loop_header
      %s15 = sphi 0, %s19
      %p16 = scmp.ge.s32.totalorder %s15, 18
      %s22 = sphi 0, %s48
      %s23 = sphi 0, %s44
      %s24 = sphi 0, %s40
      %s25 = sphi 0, %s36
      %s26 = sphi 0, %s22
      %s27 = sphi 0, %s23
      %s28 = sphi 0, %s24
      %s29 = sphi 0, %s25
      %s30 = sphi 0, %s26
      %s31 = sphi 0, %s27
      %s32 = sphi 0, %s28
      %s33 = sphi 0, %s29
      %s55 = sphi 0, %s57
      %s58 = sphi 0, %s55
      %s59 = sphi 0, %s58
      %s75 = sphi 0, %s59
      %s85 = sphi 0, %s87
      %s88 = sphi 0, %s85
      %s89 = sphi 0, %s88
      %s105 = sphi 0, %s89
      %s115 = sphi 0, %s117
      %s118 = sphi 0, %s115
      %s119 = sphi 0, %s118
      %s135 = sphi 0, %s119
    $region4: #{tpu_custom_call.1} parent=1 // loop_header_branch
      %18 = sbr.rel (%p16) target = $region8
    $region5: #{tpu_custom_call.1} parent=1 // loop_body
      %s20 = ssub.s32 %s15, 1
      %s21 = ssub.s32 %s15, 2
      %s34 = sadd.s32 1, %s25
      %p35 = scmp.ge.s32.totalorder %s34, 1
      %s36 = scalar_select %p35, 0, %s34
      %s37 = sadd.s32 1, %s24
      %s38 = scalar_select %p35, %s37, %s24
      %p39 = scmp.ge.s32.totalorder %s38, 1
      %s40 = scalar_select %p39, 0, %s38
      %s41 = sadd.s32 1, %s23
      %s42 = scalar_select %p39, %s41, %s23
      %p43 = scmp.ge.s32.totalorder %s42, 16
      %s44 = scalar_select %p43, 0, %s42
      %s45 = sadd.s32 1, %s22
      %s46 = scalar_select %p43, %s45, %s22
      %p47 = scmp.ge.s32.totalorder %s46, 1
      %s48 = scalar_select %p47, 0, %s46
      %s49 = ssub.s32 %s22, %s48
      %s50 = ssub.s32 %s23, %s44
      %s51 = sor.u32 %s49, %s50
      %s52 = ssub.s32 %s25, %s36
      %s53 = sor.u32 %s51, %s52
      %p54 = scmp.eq.s32.totalorder %s53, 0
      %s56 = sadd.s32 %s55, 1
      %s57 = scalar_select %p54, %s55, %s56
      %p60 = pneg %p54
      %p61 = scmp.eq.s32.totalorder %s15, 15
      %p62 = por %p60, %p61
      %p63 = scmp.ne.s32.totalorder %s55, %s58
      %p64 = scmp.eq.s32.totalorder %s15, 0
      %p65 = por %p63, %p64
      %p66 = scmp.ne.s32.totalorder %s55, %s58
      %p67 = scmp.eq.s32.totalorder %s20, 15
      %p68 = por %p66, %p67
      %p69 = scmp.ne.s32.totalorder %s58, %s59
      %p70 = scmp.eq.s32.totalorder %s20, 0
      %p71 = por %p69, %p70
      %p72 = scmp.ne.s32.totalorder %s58, %s59
      %p73 = scmp.eq.s32.totalorder %s21, 15
      %p74 = por %p72, %p73
      %p76 = scmp.ne.s32.totalorder %s59, %s75
      %p77 = scmp.eq.s32.totalorder %s21, 0
      %p78 = por %p76, %p77
      %s79 = ssub.s32 %s22, %s48
      %s80 = ssub.s32 %s25, %s36
      %s81 = sor.u32 %s79, %s80
      %s82 = ssub.s32 %s24, %s40
      %s83 = sor.u32 %s81, %s82
      %p84 = scmp.eq.s32.totalorder %s83, 0
      %s86 = sadd.s32 %s85, 1
      %s87 = scalar_select %p84, %s85, %s86
      %p90 = pneg %p84
      %p91 = scmp.eq.s32.totalorder %s15, 15
      %p92 = por %p90, %p91
      %p93 = scmp.ne.s32.totalorder %s85, %s88
      %p94 = scmp.eq.s32.totalorder %s15, 0
      %p95 = por %p93, %p94
      %p96 = scmp.ne.s32.totalorder %s85, %s88
      %p97 = scmp.eq.s32.totalorder %s20, 15
      %p98 = por %p96, %p97
      %p99 = scmp.ne.s32.totalorder %s88, %s89
      %p100 = scmp.eq.s32.totalorder %s20, 0
      %p101 = por %p99, %p100
      %p102 = scmp.ne.s32.totalorder %s88, %s89
      %p103 = scmp.eq.s32.totalorder %s21, 15
      %p104 = por %p102, %p103
      %p106 = scmp.ne.s32.totalorder %s89, %s105
      %p107 = scmp.eq.s32.totalorder %s21, 0
      %p108 = por %p106, %p107
      %s109 = ssub.s32 %s22, %s48
      %s110 = ssub.s32 %s23, %s44
      %s111 = sor.u32 %s109, %s110
      %s112 = ssub.s32 %s24, %s40
      %s113 = sor.u32 %s111, %s112
      %p114 = scmp.eq.s32.totalorder %s113, 0
      %s116 = sadd.s32 %s115, 1
      %s117 = scalar_select %p114, %s115, %s116
      %p120 = pneg %p114
      %p121 = scmp.eq.s32.totalorder %s15, 15
      %p122 = por %p120, %p121
      %p123 = scmp.ne.s32.totalorder %s115, %s118
      %p124 = scmp.eq.s32.totalorder %s15, 0
      %p125 = por %p123, %p124
      %p126 = scmp.ne.s32.totalorder %s115, %s118
      %p127 = scmp.eq.s32.totalorder %s20, 15
      %p128 = por %p126, %p127
      %p129 = scmp.ne.s32.totalorder %s118, %s119
      %p130 = scmp.eq.s32.totalorder %s20, 0
      %p131 = por %p129, %p130
      %p132 = scmp.ne.s32.totalorder %s118, %s119
      %p133 = scmp.eq.s32.totalorder %s21, 15
      %p134 = por %p132, %p133
      %p136 = scmp.ne.s32.totalorder %s119, %s135
      %p137 = scmp.eq.s32.totalorder %s21, 0
      %p138 = por %p136, %p137
      %p139 = scmp.le.s32.totalorder 1, %s15
      %p140 = scmp.lt.s32.totalorder %s15, 17
      %p141 = pnand %p139, %p140
      %p142 = pneg %p141
      // Predicated region
      $region9: #{tpu_custom_call.1} parent=5 // pred_check
        _
      $region10: #{tpu_custom_call.1} parent=5 // pred_check_branch
        %144 = sbr.rel (%p141) target = $region12
      $region11: #{tpu_custom_call.1} parent=5 // pred_region
        %s145 = ssub.s32 %s15, 1
        // Predicated region
        $region13: #{tpu_custom_call.1} parent=11 // pred_check
          %p146 = pneg %p101
        $region14: #{tpu_custom_call.1} parent=11 // pred_check_branch
          %148 = sbr.rel (%p146) target = $region16
        $region15: #{tpu_custom_call.1} parent=11 // pred_region
          %s149 = smul.u32 16, %s29
          %s151 = ssub.s32 1024, 1024
          %152 = vsyncadd [#allocation7], %s151
          %s153 = sadd.s32 %s28, %s149
          %s154 = smul.addr %s26, 16
          %s155 = sadd.s32 %s153, %s154
          %s156 = smul.addr %s155, 64
          %s157 = scalar_lea.hbm %s1, %s156
          %s158 = sshll.u32 [#allocation6], 4
          %s159 = int_to_ptr.vmem [resolvable:$true] %s158
          %164 = dma.hbm_to_vmem [thread:$0]  %s157, 1024, %s159, [#allocation7], 64, 64, 4
        $region16: #{tpu_custom_call.1} parent=11 // pred_fallthru
          _
      $region12: #{tpu_custom_call.1} parent=5 // pred_fallthru
        _
      %p165 = scmp.lt.s32.totalorder %s15, 16
      // Predicated region
      $region17: #{tpu_custom_call.1} parent=5 // pred_check
        %p166 = pneg %p165
      $region18: #{tpu_custom_call.1} parent=5 // pred_check_branch
        %168 = sbr.rel (%p166) target = $region20
      $region19: #{tpu_custom_call.1} parent=5 // pred_region
        // Predicated region
        $region21: #{tpu_custom_call.1} parent=19 // pred_check
          %p169 = pneg %p65
        $region22: #{tpu_custom_call.1} parent=19 // pred_check_branch
          %171 = sbr.rel (%p169) target = $region24
        $region23: #{tpu_custom_call.1} parent=19 // pred_region
          %s172 = sand.u32 %s55, 1
          %s173 = scalar_lea.sflag [#allocation4], %s172
          %s174 = sand.u32 %s55, 1
          %s175 = smul.addr %s174, 256
          %s176 = scalar_lea.vmem [#allocation3], %s175
          %s177 = smul.u32 64, %s23
          %s179 = ssub.s32 4096, 4096
          %180 = vsyncadd %s173, %s179
          %s181 = sadd.s32 %s25, %s177
          %s182 = smul.addr %s22, 1024
          %s183 = sadd.s32 %s181, %s182
          %s184 = smul.addr %s183, 64
          %s185 = scalar_lea.hbm %s0, %s184
          %s186 = sshll.u32 %s176, 4
          %s187 = int_to_ptr.vmem [resolvable:$true] %s186
          %192 = dma.hbm_to_vmem [thread:$0]  %s185, 4096, %s187, %s173, 64, 64, 4
        $region24: #{tpu_custom_call.1} parent=19 // pred_fallthru
          _
      $region20: #{tpu_custom_call.1} parent=5 // pred_fallthru
        _
      %p193 = scmp.le.s32.totalorder 1, %s15
      %p194 = scmp.lt.s32.totalorder %s15, 17
      %p195 = pnand %p193, %p194
      %p196 = pneg %p195
      // Predicated region
      $region25: #{tpu_custom_call.1} parent=5 // pred_check
        _
      $region26: #{tpu_custom_call.1} parent=5 // pred_check_branch
        %198 = sbr.rel (%p195) target = $region28
      $region27: #{tpu_custom_call.1} parent=5 // pred_region
        %s199 = ssub.s32 %s15, 1
        %s200 = sand.u32 %s58, 1
        %s201 = scalar_lea.sflag [#allocation4], %s200
        %s202 = sand.u32 %s58, 1
        %s203 = smul.addr %s202, 256
        %s204 = scalar_lea.vmem [#allocation3], %s203
        // Predicated region
        $region29: #{tpu_custom_call.1} parent=27 // pred_check
          %p205 = pneg %p71
        $region30: #{tpu_custom_call.1} parent=27 // pred_check_branch
          %207 = sbr.rel (%p205) target = $region32
        $region31: #{tpu_custom_call.1} parent=27 // pred_region
          %208 = dma.done %s201, 4096
        $region32: #{tpu_custom_call.1} parent=27 // pred_fallthru
          _
        // Predicated region
        $region33: #{tpu_custom_call.1} parent=27 // pred_check
          %p209 = pneg %p101
        $region34: #{tpu_custom_call.1} parent=27 // pred_check_branch
          %211 = sbr.rel (%p209) target = $region36
        $region35: #{tpu_custom_call.1} parent=27 // pred_region
          %212 = dma.done [#allocation7], 1024
        $region36: #{tpu_custom_call.1} parent=27 // pred_fallthru
          _
        %s213 = sand.u32 %s58, 1
        %s214 = scalar_lea.sflag [#allocation4], %s213
        %s215 = sand.u32 %s58, 1
        %s216 = smul.addr %s215, 256
        %s217 = scalar_lea.vmem [#allocation3], %s216
        %p218 = pneg %p71
        %p219 = pneg %p68
        %p220 = pneg %p101
        %p221 = pneg %p98
        %p222 = pneg %p131
        %p223 = pneg %p128
        %s224 = sand.u32 %s118, 1
        %s225 = scalar_lea.sflag [#allocation5], %s224
        %s226 = sand.u32 %s118, 1
        %s227 = smul.addr %s226, 256
        %s228 = scalar_lea.vmem [#allocation8], %s227
        %s229 = smul.u32 64, %s27
        %s230 = smul.u32 16, %s29
        %s231 = smul.u32 64, %s27
        %p233 = scmp.eq.s32.totalorder %s29, 0
        // Predicated region
        $region37: #{tpu_custom_call.1} parent=27 // pred_check
          %p234 = pneg %p233
        $region38: #{tpu_custom_call.1} parent=27 // pred_check_branch
          %236 = sbr.rel (%p234) target = $region40
        $region39: #{tpu_custom_call.1} parent=27 // pred_region
          %237 = vst [vmem:[#allocation2] sm:$0xff] 0.0
          %238 = vst [vmem:[#allocation2 + $0x8] sm:$0xff] 0.0
          %239 = vst [vmem:[#allocation2 + $0x10] sm:$0xff] 0.0
          %240 = vst [vmem:[#allocation2 + $0x18] sm:$0xff] 0.0
          %241 = vst [vmem:[#allocation2 + $0x20] sm:$0xff] 0.0
          %242 = vst [vmem:[#allocation2 + $0x28] sm:$0xff] 0.0
          %243 = vst [vmem:[#allocation2 + $0x30] sm:$0xff] 0.0
          %244 = vst [vmem:[#allocation2 + $0x38] sm:$0xff] 0.0
          %245 = vst [vmem:[#allocation2 + $0x40] sm:$0xff] 0.0
          %246 = vst [vmem:[#allocation2 + $0x48] sm:$0xff] 0.0
          %247 = vst [vmem:[#allocation2 + $0x50] sm:$0xff] 0.0
          %248 = vst [vmem:[#allocation2 + $0x58] sm:$0xff] 0.0
          %249 = vst [vmem:[#allocation2 + $0x60] sm:$0xff] 0.0
          %250 = vst [vmem:[#allocation2 + $0x68] sm:$0xff] 0.0
          %251 = vst [vmem:[#allocation2 + $0x70] sm:$0xff] 0.0
          %252 = vst [vmem:[#allocation2 + $0x78] sm:$0xff] 0.0
          %253 = vst [vmem:[#allocation2 + $0x80] sm:$0xff] 0.0
          %254 = vst [vmem:[#allocation2 + $0x88] sm:$0xff] 0.0
          %255 = vst [vmem:[#allocation2 + $0x90] sm:$0xff] 0.0
          %256 = vst [vmem:[#allocation2 + $0x98] sm:$0xff] 0.0
          %257 = vst [vmem:[#allocation2 + $0xa0] sm:$0xff] 0.0
          %258 = vst [vmem:[#allocation2 + $0xa8] sm:$0xff] 0.0
          %259 = vst [vmem:[#allocation2 + $0xb0] sm:$0xff] 0.0
          %260 = vst [vmem:[#allocation2 + $0xb8] sm:$0xff] 0.0
          %261 = vst [vmem:[#allocation2 + $0xc0] sm:$0xff] 0.0
          %262 = vst [vmem:[#allocation2 + $0xc8] sm:$0xff] 0.0
          %263 = vst [vmem:[#allocation2 + $0xd0] sm:$0xff] 0.0
          %264 = vst [vmem:[#allocation2 + $0xd8] sm:$0xff] 0.0
          %265 = vst [vmem:[#allocation2 + $0xe0] sm:$0xff] 0.0
          %266 = vst [vmem:[#allocation2 + $0xe8] sm:$0xff] 0.0
          %267 = vst [vmem:[#allocation2 + $0xf0] sm:$0xff] 0.0
          %268 = vst [vmem:[#allocation2 + $0xf8] sm:$0xff] 0.0
          %269 = vst [vmem:[#allocation2 + $0x100] sm:$0xff] 0.0
          %270 = vst [vmem:[#allocation2 + $0x108] sm:$0xff] 0.0
          %271 = vst [vmem:[#allocation2 + $0x110] sm:$0xff] 0.0
          %272 = vst [vmem:[#allocation2 + $0x118] sm:$0xff] 0.0
          %273 = vst [vmem:[#allocation2 + $0x120] sm:$0xff] 0.0
          %274 = vst [vmem:[#allocation2 + $0x128] sm:$0xff] 0.0
          %275 = vst [vmem:[#allocation2 + $0x130] sm:$0xff] 0.0
          %276 = vst [vmem:[#allocation2 + $0x138] sm:$0xff] 0.0
          %277 = vst [vmem:[#allocation2 + $0x140] sm:$0xff] 0.0
          %278 = vst [vmem:[#allocation2 + $0x148] sm:$0xff] 0.0
          %279 = vst [vmem:[#allocation2 + $0x150] sm:$0xff] 0.0
          %280 = vst [vmem:[#allocation2 + $0x158] sm:$0xff] 0.0
          %281 = vst [vmem:[#allocation2 + $0x160] sm:$0xff] 0.0
          %282 = vst [vmem:[#allocation2 + $0x168] sm:$0xff] 0.0
          %283 = vst [vmem:[#allocation2 + $0x170] sm:$0xff] 0.0
          %284 = vst [vmem:[#allocation2 + $0x178] sm:$0xff] 0.0
          %285 = vst [vmem:[#allocation2 + $0x180] sm:$0xff] 0.0
          %286 = vst [vmem:[#allocation2 + $0x188] sm:$0xff] 0.0
          %287 = vst [vmem:[#allocation2 + $0x190] sm:$0xff] 0.0
          %288 = vst [vmem:[#allocation2 + $0x198] sm:$0xff] 0.0
          %289 = vst [vmem:[#allocation2 + $0x1a0] sm:$0xff] 0.0
          %290 = vst [vmem:[#allocation2 + $0x1a8] sm:$0xff] 0.0
          %291 = vst [vmem:[#allocation2 + $0x1b0] sm:$0xff] 0.0
          %292 = vst [vmem:[#allocation2 + $0x1b8] sm:$0xff] 0.0
          %293 = vst [vmem:[#allocation2 + $0x1c0] sm:$0xff] 0.0
          %294 = vst [vmem:[#allocation2 + $0x1c8] sm:$0xff] 0.0
          %295 = vst [vmem:[#allocation2 + $0x1d0] sm:$0xff] 0.0
          %296 = vst [vmem:[#allocation2 + $0x1d8] sm:$0xff] 0.0
          %297 = vst [vmem:[#allocation2 + $0x1e0] sm:$0xff] 0.0
          %298 = vst [vmem:[#allocation2 + $0x1e8] sm:$0xff] 0.0
          %299 = vst [vmem:[#allocation2 + $0x1f0] sm:$0xff] 0.0
          %300 = vst [vmem:[#allocation2 + $0x1f8] sm:$0xff] 0.0
        $region40: #{tpu_custom_call.1} parent=27 // pred_fallthru
          _
        %v301 = vld [vmem:[#allocation2] sm:$0xff]
        %v302 = vld [vmem:[#allocation2 + $0x8] sm:$0xff]
        %v303 = vld [vmem:[#allocation2 + $0x10] sm:$0xff]
        %v304 = vld [vmem:[#allocation2 + $0x18] sm:$0xff]
        %v305 = vld [vmem:[#allocation2 + $0x20] sm:$0xff]
        %v306 = vld [vmem:[#allocation2 + $0x28] sm:$0xff]
        %v307 = vld [vmem:[#allocation2 + $0x30] sm:$0xff]
        %v308 = vld [vmem:[#allocation2 + $0x38] sm:$0xff]
        %v309 = vld [vmem:[#allocation2 + $0x40] sm:$0xff]
        %v310 = vld [vmem:[#allocation2 + $0x48] sm:$0xff]
        %v311 = vld [vmem:[#allocation2 + $0x50] sm:$0xff]
        %v312 = vld [vmem:[#allocation2 + $0x58] sm:$0xff]
        %v313 = vld [vmem:[#allocation2 + $0x60] sm:$0xff]
        %v314 = vld [vmem:[#allocation2 + $0x68] sm:$0xff]
        %v315 = vld [vmem:[#allocation2 + $0x70] sm:$0xff]
        %v316 = vld [vmem:[#allocation2 + $0x78] sm:$0xff]
        %v317 = vld [vmem:[#allocation2 + $0x80] sm:$0xff]
        %v318 = vld [vmem:[#allocation2 + $0x88] sm:$0xff]
        %v319 = vld [vmem:[#allocation2 + $0x90] sm:$0xff]
        %v320 = vld [vmem:[#allocation2 + $0x98] sm:$0xff]
        %v321 = vld [vmem:[#allocation2 + $0xa0] sm:$0xff]
        %v322 = vld [vmem:[#allocation2 + $0xa8] sm:$0xff]
        %v323 = vld [vmem:[#allocation2 + $0xb0] sm:$0xff]
        %v324 = vld [vmem:[#allocation2 + $0xb8] sm:$0xff]
        %v325 = vld [vmem:[#allocation2 + $0xc0] sm:$0xff]
        %v326 = vld [vmem:[#allocation2 + $0xc8] sm:$0xff]
        %v327 = vld [vmem:[#allocation2 + $0xd0] sm:$0xff]
        %v328 = vld [vmem:[#allocation2 + $0xd8] sm:$0xff]
        %v329 = vld [vmem:[#allocation2 + $0xe0] sm:$0xff]
        %v330 = vld [vmem:[#allocation2 + $0xe8] sm:$0xff]
        %v331 = vld [vmem:[#allocation2 + $0xf0] sm:$0xff]
        %v332 = vld [vmem:[#allocation2 + $0xf8] sm:$0xff]
        %v333 = vld [vmem:[#allocation2 + $0x100] sm:$0xff]
        %v334 = vld [vmem:[#allocation2 + $0x108] sm:$0xff]
        %v335 = vld [vmem:[#allocation2 + $0x110] sm:$0xff]
        %v336 = vld [vmem:[#allocation2 + $0x118] sm:$0xff]
        %v337 = vld [vmem:[#allocation2 + $0x120] sm:$0xff]
        %v338 = vld [vmem:[#allocation2 + $0x128] sm:$0xff]
        %v339 = vld [vmem:[#allocation2 + $0x130] sm:$0xff]
        %v340 = vld [vmem:[#allocation2 + $0x138] sm:$0xff]
        %v341 = vld [vmem:[#allocation2 + $0x140] sm:$0xff]
        %v342 = vld [vmem:[#allocation2 + $0x148] sm:$0xff]
        %v343 = vld [vmem:[#allocation2 + $0x150] sm:$0xff]
        %v344 = vld [vmem:[#allocation2 + $0x158] sm:$0xff]
        %v345 = vld [vmem:[#allocation2 + $0x160] sm:$0xff]
        %v346 = vld [vmem:[#allocation2 + $0x168] sm:$0xff]
        %v347 = vld [vmem:[#allocation2 + $0x170] sm:$0xff]
        %v348 = vld [vmem:[#allocation2 + $0x178] sm:$0xff]
        %v349 = vld [vmem:[#allocation2 + $0x180] sm:$0xff]
        %v350 = vld [vmem:[#allocation2 + $0x188] sm:$0xff]
        %v351 = vld [vmem:[#allocation2 + $0x190] sm:$0xff]
        %v352 = vld [vmem:[#allocation2 + $0x198] sm:$0xff]
        %v353 = vld [vmem:[#allocation2 + $0x1a0] sm:$0xff]
        %v354 = vld [vmem:[#allocation2 + $0x1a8] sm:$0xff]
        %v355 = vld [vmem:[#allocation2 + $0x1b0] sm:$0xff]
        %v356 = vld [vmem:[#allocation2 + $0x1b8] sm:$0xff]
        %v357 = vld [vmem:[#allocation2 + $0x1c0] sm:$0xff]
        %v358 = vld [vmem:[#allocation2 + $0x1c8] sm:$0xff]
        %v359 = vld [vmem:[#allocation2 + $0x1d0] sm:$0xff]
        %v360 = vld [vmem:[#allocation2 + $0x1d8] sm:$0xff]
        %v361 = vld [vmem:[#allocation2 + $0x1e0] sm:$0xff]
        %v362 = vld [vmem:[#allocation2 + $0x1e8] sm:$0xff]
        %v363 = vld [vmem:[#allocation2 + $0x1f0] sm:$0xff]
        %v364 = vld [vmem:[#allocation2 + $0x1f8] sm:$0xff]
        %v365 = vld [vmem:[%s204] sm:$0xf]
        %v366 = vld [vmem:[%s204 + $0x4] sm:$0xf]
        %v367 = vld [vmem:[%s204 + $0x8] sm:$0xf]
        %v368 = vld [vmem:[%s204 + $0xc] sm:$0xf]
        %v369 = vld [vmem:[%s204 + $0x10] sm:$0xf]
        %v370 = vld [vmem:[%s204 + $0x14] sm:$0xf]
        %v371 = vld [vmem:[%s204 + $0x18] sm:$0xf]
        %v372 = vld [vmem:[%s204 + $0x1c] sm:$0xf]
        %v373 = vld [vmem:[%s204 + $0x20] sm:$0xf]
        %v374 = vld [vmem:[%s204 + $0x24] sm:$0xf]
        %v375 = vld [vmem:[%s204 + $0x28] sm:$0xf]
        %v376 = vld [vmem:[%s204 + $0x2c] sm:$0xf]
        %v377 = vld [vmem:[%s204 + $0x30] sm:$0xf]
        %v378 = vld [vmem:[%s204 + $0x34] sm:$0xf]
        %v379 = vld [vmem:[%s204 + $0x38] sm:$0xf]
        %v380 = vld [vmem:[%s204 + $0x3c] sm:$0xf]
        %v381 = vld [vmem:[%s204 + $0x40] sm:$0xf]
        %v382 = vld [vmem:[%s204 + $0x44] sm:$0xf]
        %v383 = vld [vmem:[%s204 + $0x48] sm:$0xf]
        %v384 = vld [vmem:[%s204 + $0x4c] sm:$0xf]
        %v385 = vld [vmem:[%s204 + $0x50] sm:$0xf]
        %v386 = vld [vmem:[%s204 + $0x54] sm:$0xf]
        %v387 = vld [vmem:[%s204 + $0x58] sm:$0xf]
        %v388 = vld [vmem:[%s204 + $0x5c] sm:$0xf]
        %v389 = vld [vmem:[%s204 + $0x60] sm:$0xf]
        %v390 = vld [vmem:[%s204 + $0x64] sm:$0xf]
        %v391 = vld [vmem:[%s204 + $0x68] sm:$0xf]
        %v392 = vld [vmem:[%s204 + $0x6c] sm:$0xf]
        %v393 = vld [vmem:[%s204 + $0x70] sm:$0xf]
        %v394 = vld [vmem:[%s204 + $0x74] sm:$0xf]
        %v395 = vld [vmem:[%s204 + $0x78] sm:$0xf]
        %v396 = vld [vmem:[%s204 + $0x7c] sm:$0xf]
        %v397 = vld [vmem:[%s204 + $0x80] sm:$0xf]
        %v398 = vld [vmem:[%s204 + $0x84] sm:$0xf]
        %v399 = vld [vmem:[%s204 + $0x88] sm:$0xf]
        %v400 = vld [vmem:[%s204 + $0x8c] sm:$0xf]
        %v401 = vld [vmem:[%s204 + $0x90] sm:$0xf]
        %v402 = vld [vmem:[%s204 + $0x94] sm:$0xf]
        %v403 = vld [vmem:[%s204 + $0x98] sm:$0xf]
        %v404 = vld [vmem:[%s204 + $0x9c] sm:$0xf]
        %v405 = vld [vmem:[%s204 + $0xa0] sm:$0xf]
        %v406 = vld [vmem:[%s204 + $0xa4] sm:$0xf]
        %v407 = vld [vmem:[%s204 + $0xa8] sm:$0xf]
        %v408 = vld [vmem:[%s204 + $0xac] sm:$0xf]
        %v409 = vld [vmem:[%s204 + $0xb0] sm:$0xf]
        %v410 = vld [vmem:[%s204 + $0xb4] sm:$0xf]
        %v411 = vld [vmem:[%s204 + $0xb8] sm:$0xf]
        %v412 = vld [vmem:[%s204 + $0xbc] sm:$0xf]
        %v413 = vld [vmem:[%s204 + $0xc0] sm:$0xf]
        %v414 = vld [vmem:[%s204 + $0xc4] sm:$0xf]
        %v415 = vld [vmem:[%s204 + $0xc8] sm:$0xf]
        %v416 = vld [vmem:[%s204 + $0xcc] sm:$0xf]
        %v417 = vld [vmem:[%s204 + $0xd0] sm:$0xf]
        %v418 = vld [vmem:[%s204 + $0xd4] sm:$0xf]
        %v419 = vld [vmem:[%s204 + $0xd8] sm:$0xf]
        %v420 = vld [vmem:[%s204 + $0xdc] sm:$0xf]
        %v421 = vld [vmem:[%s204 + $0xe0] sm:$0xf]
        %v422 = vld [vmem:[%s204 + $0xe4] sm:$0xf]
        %v423 = vld [vmem:[%s204 + $0xe8] sm:$0xf]
        %v424 = vld [vmem:[%s204 + $0xec] sm:$0xf]
        %v425 = vld [vmem:[%s204 + $0xf0] sm:$0xf]
        %v426 = vld [vmem:[%s204 + $0xf4] sm:$0xf]
        %v427 = vld [vmem:[%s204 + $0xf8] sm:$0xf]
        %v428 = vld [vmem:[%s204 + $0xfc] sm:$0xf]
        %v429 = vld [vmem:[#allocation6] sm:$0xf]
        %v430 = vld [vmem:[#allocation6 + $0x4] sm:$0xf]
        %v431 = vld [vmem:[#allocation6 + $0x8] sm:$0xf]
        %v432 = vld [vmem:[#allocation6 + $0xc] sm:$0xf]
        %v433 = vld [vmem:[#allocation6 + $0x10] sm:$0xf]
        %v434 = vld [vmem:[#allocation6 + $0x14] sm:$0xf]
        %v435 = vld [vmem:[#allocation6 + $0x18] sm:$0xf]
        %v436 = vld [vmem:[#allocation6 + $0x1c] sm:$0xf]
        %v437 = vld [vmem:[#allocation6 + $0x20] sm:$0xf]
        %v438 = vld [vmem:[#allocation6 + $0x24] sm:$0xf]
        %v439 = vld [vmem:[#allocation6 + $0x28] sm:$0xf]
        %v440 = vld [vmem:[#allocation6 + $0x2c] sm:$0xf]
        %v441 = vld [vmem:[#allocation6 + $0x30] sm:$0xf]
        %v442 = vld [vmem:[#allocation6 + $0x34] sm:$0xf]
        %v443 = vld [vmem:[#allocation6 + $0x38] sm:$0xf]
        %v444 = vld [vmem:[#allocation6 + $0x3c] sm:$0xf]
        %v509 = vunpack.c.l.b16 %v365
        %v510 = vunpack.c.l.b16 %v366
        %v511 = vunpack.c.l.b16 %v367
        %v512 = vunpack.c.l.b16 %v368
        %v513 = vunpack.c.l.b16 %v369
        %v514 = vunpack.c.l.b16 %v370
        %v515 = vunpack.c.l.b16 %v371
        %v516 = vunpack.c.l.b16 %v372
        %v517 = vunpack.c.l.b16 %v373
        %v518 = vunpack.c.l.b16 %v374
        %v519 = vunpack.c.l.b16 %v375
        %v520 = vunpack.c.l.b16 %v376
        %v521 = vunpack.c.l.b16 %v377
        %v522 = vunpack.c.l.b16 %v378
        %v523 = vunpack.c.l.b16 %v379
        %v524 = vunpack.c.l.b16 %v380
        %v525 = vunpack.c.l.b16 %v381
        %v526 = vunpack.c.l.b16 %v382
        %v527 = vunpack.c.l.b16 %v383
        %v528 = vunpack.c.l.b16 %v384
        %v529 = vunpack.c.l.b16 %v385
        %v530 = vunpack.c.l.b16 %v386
        %v531 = vunpack.c.l.b16 %v387
        %v532 = vunpack.c.l.b16 %v388
        %v533 = vunpack.c.l.b16 %v389
        %v534 = vunpack.c.l.b16 %v390
        %v535 = vunpack.c.l.b16 %v391
        %v536 = vunpack.c.l.b16 %v392
        %v537 = vunpack.c.l.b16 %v393
        %v538 = vunpack.c.l.b16 %v394
        %v539 = vunpack.c.l.b16 %v395
        %v540 = vunpack.c.l.b16 %v396
        %v541 = vunpack.c.l.b16 %v397
        %v542 = vunpack.c.l.b16 %v398
        %v543 = vunpack.c.l.b16 %v399
        %v544 = vunpack.c.l.b16 %v400
        %v545 = vunpack.c.l.b16 %v401
        %v546 = vunpack.c.l.b16 %v402
        %v547 = vunpack.c.l.b16 %v403
        %v548 = vunpack.c.l.b16 %v404
        %v549 = vunpack.c.l.b16 %v405
        %v550 = vunpack.c.l.b16 %v406
        %v551 = vunpack.c.l.b16 %v407
        %v552 = vunpack.c.l.b16 %v408
        %v553 = vunpack.c.l.b16 %v409
        %v554 = vunpack.c.l.b16 %v410
        %v555 = vunpack.c.l.b16 %v411
        %v556 = vunpack.c.l.b16 %v412
        %v557 = vunpack.c.l.b16 %v413
        %v558 = vunpack.c.l.b16 %v414
        %v559 = vunpack.c.l.b16 %v415
        %v560 = vunpack.c.l.b16 %v416
        %v561 = vunpack.c.l.b16 %v417
        %v562 = vunpack.c.l.b16 %v418
        %v563 = vunpack.c.l.b16 %v419
        %v564 = vunpack.c.l.b16 %v420
        %v565 = vunpack.c.l.b16 %v421
        %v566 = vunpack.c.l.b16 %v422
        %v567 = vunpack.c.l.b16 %v423
        %v568 = vunpack.c.l.b16 %v424
        %v569 = vunpack.c.l.b16 %v425
        %v570 = vunpack.c.l.b16 %v426
        %v571 = vunpack.c.l.b16 %v427
        %v572 = vunpack.c.l.b16 %v428
        %v573 = vpack.c.b16 %v510, %v509
        %v574 = vpack.c.b16 %v512, %v511
        %v575 = vpack.c.b16 %v514, %v513
        %v576 = vpack.c.b16 %v516, %v515
        %v577 = vpack.c.b16 %v518, %v517
        %v578 = vpack.c.b16 %v520, %v519
        %v579 = vpack.c.b16 %v522, %v521
        %v580 = vpack.c.b16 %v524, %v523
        %v581 = vpack.c.b16 %v526, %v525
        %v582 = vpack.c.b16 %v528, %v527
        %v583 = vpack.c.b16 %v530, %v529
        %v584 = vpack.c.b16 %v532, %v531
        %v585 = vpack.c.b16 %v534, %v533
        %v586 = vpack.c.b16 %v536, %v535
        %v587 = vpack.c.b16 %v538, %v537
        %v588 = vpack.c.b16 %v540, %v539
        %v589 = vpack.c.b16 %v542, %v541
        %v590 = vpack.c.b16 %v544, %v543
        %v591 = vpack.c.b16 %v546, %v545
        %v592 = vpack.c.b16 %v548, %v547
        %v593 = vpack.c.b16 %v550, %v549
        %v594 = vpack.c.b16 %v552, %v551
        %v595 = vpack.c.b16 %v554, %v553
        %v596 = vpack.c.b16 %v556, %v555
        %v597 = vpack.c.b16 %v558, %v557
        %v598 = vpack.c.b16 %v560, %v559
        %v599 = vpack.c.b16 %v562, %v561
        %v600 = vpack.c.b16 %v564, %v563
        %v601 = vpack.c.b16 %v566, %v565
        %v602 = vpack.c.b16 %v568, %v567
        %v603 = vpack.c.b16 %v570, %v569
        %v604 = vpack.c.b16 %v572, %v571
        %v653 = vunpack.c.l.b16 %v429
        %v654 = vunpack.c.l.b16 %v430
        %v655 = vunpack.c.l.b16 %v431
        %v656 = vunpack.c.l.b16 %v432
        %v657 = vunpack.c.l.b16 %v433
        %v658 = vunpack.c.l.b16 %v434
        %v659 = vunpack.c.l.b16 %v435
        %v660 = vunpack.c.l.b16 %v436
        %v661 = vunpack.c.l.b16 %v437
        %v662 = vunpack.c.l.b16 %v438
        %v663 = vunpack.c.l.b16 %v439
        %v664 = vunpack.c.l.b16 %v440
        %v665 = vunpack.c.l.b16 %v441
        %v666 = vunpack.c.l.b16 %v442
        %v667 = vunpack.c.l.b16 %v443
        %v668 = vunpack.c.l.b16 %v444
        %v669 = vpack.c.b16 %v654, %v653
        %v670 = vpack.c.b16 %v656, %v655
        %v671 = vpack.c.b16 %v658, %v657
        %v672 = vpack.c.b16 %v660, %v659
        %v673 = vpack.c.b16 %v662, %v661
        %v674 = vpack.c.b16 %v664, %v663
        %v675 = vpack.c.b16 %v666, %v665
        %v676 = vpack.c.b16 %v668, %v667
        %685 = vmatprep.subr.bf16.mxu0 0
        %686 = vmatpush1.bf16.msra.mxu0 %v676
        %687 = vmatprep.subr.bf16.mxu0 0
        %688 = vmatpush1.bf16.msra.mxu0 %v675
        %689 = vmatprep.subr.bf16.mxu0 0
        %690 = vmatpush1.bf16.msra.mxu0 %v674
        %691 = vmatprep.subr.bf16.mxu0 0
        %692 = vmatpush1.bf16.msra.mxu0 %v673
        %693 = vmatprep.subr.bf16.mxu0 0
        %694 = vmatpush1.bf16.msra.mxu0 %v672
        %695 = vmatprep.subr.bf16.mxu0 0
        %696 = vmatpush1.bf16.msra.mxu0 %v671
        %697 = vmatprep.subr.bf16.mxu0 0
        %698 = vmatpush1.bf16.msra.mxu0 %v670
        %699 = vmatprep.subr.bf16.mxu0 0
        %700 = vmatpush1.bf16.msra.mxu0 %v669
        %701 = vmatprep.subr.bf16.mxu0 0
        %702 = vmatpush2.bf16.msra.mxu0 0
        %703 = vmatprep.subr.bf16.mxu0 0
        %704 = vmatpush2.bf16.msra.mxu0 0
        %705 = vmatprep.subr.bf16.mxu0 0
        %706 = vmatpush2.bf16.msra.mxu0 0
        %707 = vmatprep.subr.bf16.mxu0 0
        %708 = vmatpush2.bf16.msra.mxu0 0
        %709 = vmatprep.subr.bf16.mxu0 0
        %710 = vmatpush2.bf16.msra.mxu0 0
        %711 = vmatprep.subr.bf16.mxu0 0
        %712 = vmatpush2.bf16.msra.mxu0 0
        %713 = vmatprep.subr.bf16.mxu0 0
        %714 = vmatpush2.bf16.msra.mxu0 0
        %715 = vmatprep.subr.bf16.mxu0 0
        %716 = vmatpush2.bf16.msra.mxu0 0
        %717 = vmatprep.mubr.bf16.mxu0 0
        %718 = vmatmul.mubr.bf16.gmra.mxu0 %v573
        %v719 = vpop.f32.mrf.mxu0
        %v720 = vadd.f32 0.0, %v719
        %v721 = vpop.f32.mrf.mxu0
        %v722 = vpop.f32.mrf.mxu0
        %v723 = vadd.f32 0.0, %v722
        %v724 = vpop.f32.mrf.mxu0
        %725 = vmatprep.mubr.bf16.mxu0 0
        %726 = vmatmul.mubr.bf16.gmra.mxu0 %v574
        %v727 = vpop.f32.mrf.mxu0
        %v728 = vadd.f32 0.0, %v727
        %v729 = vpop.f32.mrf.mxu0
        %v730 = vpop.f32.mrf.mxu0
        %v731 = vadd.f32 0.0, %v730
        %v732 = vpop.f32.mrf.mxu0
        %733 = vmatprep.mubr.bf16.mxu0 0
        %734 = vmatmul.mubr.bf16.gmra.mxu0 %v575
        %v735 = vpop.f32.mrf.mxu0
        %v736 = vadd.f32 0.0, %v735
        %v737 = vpop.f32.mrf.mxu0
        %v738 = vpop.f32.mrf.mxu0
        %v739 = vadd.f32 0.0, %v738
        %v740 = vpop.f32.mrf.mxu0
        %741 = vmatprep.mubr.bf16.mxu0 0
        %742 = vmatmul.mubr.bf16.gmra.mxu0 %v576
        %v743 = vpop.f32.mrf.mxu0
        %v744 = vadd.f32 0.0, %v743
        %v745 = vpop.f32.mrf.mxu0
        %v746 = vpop.f32.mrf.mxu0
        %v747 = vadd.f32 0.0, %v746
        %v748 = vpop.f32.mrf.mxu0
        %749 = vmatprep.mubr.bf16.mxu0 0
        %750 = vmatmul.mubr.bf16.gmra.mxu0 %v577
        %v751 = vpop.f32.mrf.mxu0
        %v752 = vadd.f32 0.0, %v751
        %v753 = vpop.f32.mrf.mxu0
        %v754 = vpop.f32.mrf.mxu0
        %v755 = vadd.f32 0.0, %v754
        %v756 = vpop.f32.mrf.mxu0
        %757 = vmatprep.mubr.bf16.mxu0 0
        %758 = vmatmul.mubr.bf16.gmra.mxu0 %v578
        %v759 = vpop.f32.mrf.mxu0
        %v760 = vadd.f32 0.0, %v759
        %v761 = vpop.f32.mrf.mxu0
        %v762 = vpop.f32.mrf.mxu0
        %v763 = vadd.f32 0.0, %v762
        %v764 = vpop.f32.mrf.mxu0
        %765 = vmatprep.mubr.bf16.mxu0 0
        %766 = vmatmul.mubr.bf16.gmra.mxu0 %v579
        %v767 = vpop.f32.mrf.mxu0
        %v768 = vadd.f32 0.0, %v767
        %v769 = vpop.f32.mrf.mxu0
        %v770 = vpop.f32.mrf.mxu0
        %v771 = vadd.f32 0.0, %v770
        %v772 = vpop.f32.mrf.mxu0
        %773 = vmatprep.mubr.bf16.mxu0 0
        %774 = vmatmul.mubr.bf16.gmra.mxu0 %v580
        %v775 = vpop.f32.mrf.mxu0
        %v776 = vadd.f32 0.0, %v775
        %v777 = vpop.f32.mrf.mxu0
        %v778 = vpop.f32.mrf.mxu0
        %v779 = vadd.f32 0.0, %v778
        %v780 = vpop.f32.mrf.mxu0
        %781 = vmatprep.mubr.bf16.mxu0 0
        %782 = vmatmul.mubr.bf16.gmra.mxu0 %v581
        %v783 = vpop.f32.mrf.mxu0
        %v784 = vadd.f32 0.0, %v783
        %v785 = vpop.f32.mrf.mxu0
        %v786 = vpop.f32.mrf.mxu0
        %v787 = vadd.f32 0.0, %v786
        %v788 = vpop.f32.mrf.mxu0
        %789 = vmatprep.mubr.bf16.mxu0 0
        %790 = vmatmul.mubr.bf16.gmra.mxu0 %v582
        %v791 = vpop.f32.mrf.mxu0
        %v792 = vadd.f32 0.0, %v791
        %v793 = vpop.f32.mrf.mxu0
        %v794 = vpop.f32.mrf.mxu0
        %v795 = vadd.f32 0.0, %v794
        %v796 = vpop.f32.mrf.mxu0
        %797 = vmatprep.mubr.bf16.mxu0 0
        %798 = vmatmul.mubr.bf16.gmra.mxu0 %v583
        %v799 = vpop.f32.mrf.mxu0
        %v800 = vadd.f32 0.0, %v799
        %v801 = vpop.f32.mrf.mxu0
        %v802 = vpop.f32.mrf.mxu0
        %v803 = vadd.f32 0.0, %v802
        %v804 = vpop.f32.mrf.mxu0
        %805 = vmatprep.mubr.bf16.mxu0 0
        %806 = vmatmul.mubr.bf16.gmra.mxu0 %v584
        %v807 = vpop.f32.mrf.mxu0
        %v808 = vadd.f32 0.0, %v807
        %v809 = vpop.f32.mrf.mxu0
        %v810 = vpop.f32.mrf.mxu0
        %v811 = vadd.f32 0.0, %v810
        %v812 = vpop.f32.mrf.mxu0
        %813 = vmatprep.mubr.bf16.mxu0 0
        %814 = vmatmul.mubr.bf16.gmra.mxu0 %v585
        %v815 = vpop.f32.mrf.mxu0
        %v816 = vadd.f32 0.0, %v815
        %v817 = vpop.f32.mrf.mxu0
        %v818 = vpop.f32.mrf.mxu0
        %v819 = vadd.f32 0.0, %v818
        %v820 = vpop.f32.mrf.mxu0
        %821 = vmatprep.mubr.bf16.mxu0 0
        %822 = vmatmul.mubr.bf16.gmra.mxu0 %v586
        %v823 = vpop.f32.mrf.mxu0
        %v824 = vadd.f32 0.0, %v823
        %v825 = vpop.f32.mrf.mxu0
        %v826 = vpop.f32.mrf.mxu0
        %v827 = vadd.f32 0.0, %v826
        %v828 = vpop.f32.mrf.mxu0
        %829 = vmatprep.mubr.bf16.mxu0 0
        %830 = vmatmul.mubr.bf16.gmra.mxu0 %v587
        %v831 = vpop.f32.mrf.mxu0
        %v832 = vadd.f32 0.0, %v831
        %v833 = vpop.f32.mrf.mxu0
        %v834 = vpop.f32.mrf.mxu0
        %v835 = vadd.f32 0.0, %v834
        %v836 = vpop.f32.mrf.mxu0
        %837 = vmatprep.mubr.bf16.mxu0 0
        %838 = vmatmul.mubr.bf16.gmra.mxu0 %v588
        %v839 = vpop.f32.mrf.mxu0
        %v840 = vadd.f32 0.0, %v839
        %v841 = vpop.f32.mrf.mxu0
        %v842 = vpop.f32.mrf.mxu0
        %v843 = vadd.f32 0.0, %v842
        %v844 = vpop.f32.mrf.mxu0
        %845 = vmatprep.mubr.bf16.mxu0 0
        %846 = vmatmul.mubr.bf16.gmra.mxu0 %v589
        %v847 = vpop.f32.mrf.mxu0
        %v848 = vadd.f32 0.0, %v847
        %v849 = vpop.f32.mrf.mxu0
        %v850 = vpop.f32.mrf.mxu0
        %v851 = vadd.f32 0.0, %v850
        %v852 = vpop.f32.mrf.mxu0
        %853 = vmatprep.mubr.bf16.mxu0 0
        %854 = vmatmul.mubr.bf16.gmra.mxu0 %v590
        %v855 = vpop.f32.mrf.mxu0
        %v856 = vadd.f32 0.0, %v855
        %v857 = vpop.f32.mrf.mxu0
        %v858 = vpop.f32.mrf.mxu0
        %v859 = vadd.f32 0.0, %v858
        %v860 = vpop.f32.mrf.mxu0
        %861 = vmatprep.mubr.bf16.mxu0 0
        %862 = vmatmul.mubr.bf16.gmra.mxu0 %v591
        %v863 = vpop.f32.mrf.mxu0
        %v864 = vadd.f32 0.0, %v863
        %v865 = vpop.f32.mrf.mxu0
        %v866 = vpop.f32.mrf.mxu0
        %v867 = vadd.f32 0.0, %v866
        %v868 = vpop.f32.mrf.mxu0
        %869 = vmatprep.mubr.bf16.mxu0 0
        %870 = vmatmul.mubr.bf16.gmra.mxu0 %v592
        %v871 = vpop.f32.mrf.mxu0
        %v872 = vadd.f32 0.0, %v871
        %v873 = vpop.f32.mrf.mxu0
        %v874 = vpop.f32.mrf.mxu0
        %v875 = vadd.f32 0.0, %v874
        %v876 = vpop.f32.mrf.mxu0
        %877 = vmatprep.mubr.bf16.mxu0 0
        %878 = vmatmul.mubr.bf16.gmra.mxu0 %v593
        %v879 = vpop.f32.mrf.mxu0
        %v880 = vadd.f32 0.0, %v879
        %v881 = vpop.f32.mrf.mxu0
        %v882 = vpop.f32.mrf.mxu0
        %v883 = vadd.f32 0.0, %v882
        %v884 = vpop.f32.mrf.mxu0
        %885 = vmatprep.mubr.bf16.mxu0 0
        %886 = vmatmul.mubr.bf16.gmra.mxu0 %v594
        %v887 = vpop.f32.mrf.mxu0
        %v888 = vadd.f32 0.0, %v887
        %v889 = vpop.f32.mrf.mxu0
        %v890 = vpop.f32.mrf.mxu0
        %v891 = vadd.f32 0.0, %v890
        %v892 = vpop.f32.mrf.mxu0
        %893 = vmatprep.mubr.bf16.mxu0 0
        %894 = vmatmul.mubr.bf16.gmra.mxu0 %v595
        %v895 = vpop.f32.mrf.mxu0
        %v896 = vadd.f32 0.0, %v895
        %v897 = vpop.f32.mrf.mxu0
        %v898 = vpop.f32.mrf.mxu0
        %v899 = vadd.f32 0.0, %v898
        %v900 = vpop.f32.mrf.mxu0
        %901 = vmatprep.mubr.bf16.mxu0 0
        %902 = vmatmul.mubr.bf16.gmra.mxu0 %v596
        %v903 = vpop.f32.mrf.mxu0
        %v904 = vadd.f32 0.0, %v903
        %v905 = vpop.f32.mrf.mxu0
        %v906 = vpop.f32.mrf.mxu0
        %v907 = vadd.f32 0.0, %v906
        %v908 = vpop.f32.mrf.mxu0
        %909 = vmatprep.mubr.bf16.mxu0 0
        %910 = vmatmul.mubr.bf16.gmra.mxu0 %v597
        %v911 = vpop.f32.mrf.mxu0
        %v912 = vadd.f32 0.0, %v911
        %v913 = vpop.f32.mrf.mxu0
        %v914 = vpop.f32.mrf.mxu0
        %v915 = vadd.f32 0.0, %v914
        %v916 = vpop.f32.mrf.mxu0
        %917 = vmatprep.mubr.bf16.mxu0 0
        %918 = vmatmul.mubr.bf16.gmra.mxu0 %v598
        %v919 = vpop.f32.mrf.mxu0
        %v920 = vadd.f32 0.0, %v919
        %v921 = vpop.f32.mrf.mxu0
        %v922 = vpop.f32.mrf.mxu0
        %v923 = vadd.f32 0.0, %v922
        %v924 = vpop.f32.mrf.mxu0
        %925 = vmatprep.mubr.bf16.mxu0 0
        %926 = vmatmul.mubr.bf16.gmra.mxu0 %v599
        %v927 = vpop.f32.mrf.mxu0
        %v928 = vadd.f32 0.0, %v927
        %v929 = vpop.f32.mrf.mxu0
        %v930 = vpop.f32.mrf.mxu0
        %v931 = vadd.f32 0.0, %v930
        %v932 = vpop.f32.mrf.mxu0
        %933 = vmatprep.mubr.bf16.mxu0 0
        %934 = vmatmul.mubr.bf16.gmra.mxu0 %v600
        %v935 = vpop.f32.mrf.mxu0
        %v936 = vadd.f32 0.0, %v935
        %v937 = vpop.f32.mrf.mxu0
        %v938 = vpop.f32.mrf.mxu0
        %v939 = vadd.f32 0.0, %v938
        %v940 = vpop.f32.mrf.mxu0
        %941 = vmatprep.mubr.bf16.mxu0 0
        %942 = vmatmul.mubr.bf16.gmra.mxu0 %v601
        %v943 = vpop.f32.mrf.mxu0
        %v944 = vadd.f32 0.0, %v943
        %v945 = vpop.f32.mrf.mxu0
        %v946 = vpop.f32.mrf.mxu0
        %v947 = vadd.f32 0.0, %v946
        %v948 = vpop.f32.mrf.mxu0
        %949 = vmatprep.mubr.bf16.mxu0 0
        %950 = vmatmul.mubr.bf16.gmra.mxu0 %v602
        %v951 = vpop.f32.mrf.mxu0
        %v952 = vadd.f32 0.0, %v951
        %v953 = vpop.f32.mrf.mxu0
        %v954 = vpop.f32.mrf.mxu0
        %v955 = vadd.f32 0.0, %v954
        %v956 = vpop.f32.mrf.mxu0
        %957 = vmatprep.mubr.bf16.mxu0 0
        %958 = vmatmul.mubr.bf16.gmra.mxu0 %v603
        %v959 = vpop.f32.mrf.mxu0
        %v960 = vadd.f32 0.0, %v959
        %v961 = vpop.f32.mrf.mxu0
        %v962 = vpop.f32.mrf.mxu0
        %v963 = vadd.f32 0.0, %v962
        %v964 = vpop.f32.mrf.mxu0
        %965 = vmatprep.mubr.bf16.mxu0 0
        %966 = vmatmul.mubr.bf16.gmra.mxu0 %v604
        %v967 = vpop.f32.mrf.mxu0
        %v968 = vadd.f32 0.0, %v967
        %v969 = vpop.f32.mrf.mxu0
        %v970 = vpop.f32.mrf.mxu0
        %v971 = vadd.f32 0.0, %v970
        %v972 = vpop.f32.mrf.mxu0
        %973 = vdwg.mxu0
        %v974 = vadd.f32 %v301, %v720
        %v975 = vadd.f32 %v302, %v723
        %v976 = vadd.f32 %v303, %v728
        %v977 = vadd.f32 %v304, %v731
        %v978 = vadd.f32 %v305, %v736
        %v979 = vadd.f32 %v306, %v739
        %v980 = vadd.f32 %v307, %v744
        %v981 = vadd.f32 %v308, %v747
        %v982 = vadd.f32 %v309, %v752
        %v983 = vadd.f32 %v310, %v755
        %v984 = vadd.f32 %v311, %v760
        %v985 = vadd.f32 %v312, %v763
        %v986 = vadd.f32 %v313, %v768
        %v987 = vadd.f32 %v314, %v771
        %v988 = vadd.f32 %v315, %v776
        %v989 = vadd.f32 %v316, %v779
        %v990 = vadd.f32 %v317, %v784
        %v991 = vadd.f32 %v318, %v787
        %v992 = vadd.f32 %v319, %v792
        %v993 = vadd.f32 %v320, %v795
        %v994 = vadd.f32 %v321, %v800
        %v995 = vadd.f32 %v322, %v803
        %v996 = vadd.f32 %v323, %v808
        %v997 = vadd.f32 %v324, %v811
        %v998 = vadd.f32 %v325, %v816
        %v999 = vadd.f32 %v326, %v819
        %v1000 = vadd.f32 %v327, %v824
        %v1001 = vadd.f32 %v328, %v827
        %v1002 = vadd.f32 %v329, %v832
        %v1003 = vadd.f32 %v330, %v835
        %v1004 = vadd.f32 %v331, %v840
        %v1005 = vadd.f32 %v332, %v843
        %v1006 = vadd.f32 %v333, %v848
        %v1007 = vadd.f32 %v334, %v851
        %v1008 = vadd.f32 %v335, %v856
        %v1009 = vadd.f32 %v336, %v859
        %v1010 = vadd.f32 %v337, %v864
        %v1011 = vadd.f32 %v338, %v867
        %v1012 = vadd.f32 %v339, %v872
        %v1013 = vadd.f32 %v340, %v875
        %v1014 = vadd.f32 %v341, %v880
        %v1015 = vadd.f32 %v342, %v883
        %v1016 = vadd.f32 %v343, %v888
        %v1017 = vadd.f32 %v344, %v891
        %v1018 = vadd.f32 %v345, %v896
        %v1019 = vadd.f32 %v346, %v899
        %v1020 = vadd.f32 %v347, %v904
        %v1021 = vadd.f32 %v348, %v907
        %v1022 = vadd.f32 %v349, %v912
        %v1023 = vadd.f32 %v350, %v915
        %v1024 = vadd.f32 %v351, %v920
        %v1025 = vadd.f32 %v352, %v923
        %v1026 = vadd.f32 %v353, %v928
        %v1027 = vadd.f32 %v354, %v931
        %v1028 = vadd.f32 %v355, %v936
        %v1029 = vadd.f32 %v356, %v939
        %v1030 = vadd.f32 %v357, %v944
        %v1031 = vadd.f32 %v358, %v947
        %v1032 = vadd.f32 %v359, %v952
        %v1033 = vadd.f32 %v360, %v955
        %v1034 = vadd.f32 %v361, %v960
        %v1035 = vadd.f32 %v362, %v963
        %v1036 = vadd.f32 %v363, %v968
        %v1037 = vadd.f32 %v364, %v971
        %1038 = vst [vmem:[#allocation2] sm:$0xff] %v974
        %1039 = vst [vmem:[#allocation2 + $0x8] sm:$0xff] %v975
        %1040 = vst [vmem:[#allocation2 + $0x10] sm:$0xff] %v976
        %1041 = vst [vmem:[#allocation2 + $0x18] sm:$0xff] %v977
        %1042 = vst [vmem:[#allocation2 + $0x20] sm:$0xff] %v978
        %1043 = vst [vmem:[#allocation2 + $0x28] sm:$0xff] %v979
        %1044 = vst [vmem:[#allocation2 + $0x30] sm:$0xff] %v980
        %1045 = vst [vmem:[#allocation2 + $0x38] sm:$0xff] %v981
        %1046 = vst [vmem:[#allocation2 + $0x40] sm:$0xff] %v982
        %1047 = vst [vmem:[#allocation2 + $0x48] sm:$0xff] %v983
        %1048 = vst [vmem:[#allocation2 + $0x50] sm:$0xff] %v984
        %1049 = vst [vmem:[#allocation2 + $0x58] sm:$0xff] %v985
        %1050 = vst [vmem:[#allocation2 + $0x60] sm:$0xff] %v986
        %1051 = vst [vmem:[#allocation2 + $0x68] sm:$0xff] %v987
        %1052 = vst [vmem:[#allocation2 + $0x70] sm:$0xff] %v988
        %1053 = vst [vmem:[#allocation2 + $0x78] sm:$0xff] %v989
        %1054 = vst [vmem:[#allocation2 + $0x80] sm:$0xff] %v990
        %1055 = vst [vmem:[#allocation2 + $0x88] sm:$0xff] %v991
        %1056 = vst [vmem:[#allocation2 + $0x90] sm:$0xff] %v992
        %1057 = vst [vmem:[#allocation2 + $0x98] sm:$0xff] %v993
        %1058 = vst [vmem:[#allocation2 + $0xa0] sm:$0xff] %v994
        %1059 = vst [vmem:[#allocation2 + $0xa8] sm:$0xff] %v995
        %1060 = vst [vmem:[#allocation2 + $0xb0] sm:$0xff] %v996
        %1061 = vst [vmem:[#allocation2 + $0xb8] sm:$0xff] %v997
        %1062 = vst [vmem:[#allocation2 + $0xc0] sm:$0xff] %v998
        %1063 = vst [vmem:[#allocation2 + $0xc8] sm:$0xff] %v999
        %1064 = vst [vmem:[#allocation2 + $0xd0] sm:$0xff] %v1000
        %1065 = vst [vmem:[#allocation2 + $0xd8] sm:$0xff] %v1001
        %1066 = vst [vmem:[#allocation2 + $0xe0] sm:$0xff] %v1002
        %1067 = vst [vmem:[#allocation2 + $0xe8] sm:$0xff] %v1003
        %1068 = vst [vmem:[#allocation2 + $0xf0] sm:$0xff] %v1004
        %1069 = vst [vmem:[#allocation2 + $0xf8] sm:$0xff] %v1005
        %1070 = vst [vmem:[#allocation2 + $0x100] sm:$0xff] %v1006
        %1071 = vst [vmem:[#allocation2 + $0x108] sm:$0xff] %v1007
        %1072 = vst [vmem:[#allocation2 + $0x110] sm:$0xff] %v1008
        %1073 = vst [vmem:[#allocation2 + $0x118] sm:$0xff] %v1009
        %1074 = vst [vmem:[#allocation2 + $0x120] sm:$0xff] %v1010
        %1075 = vst [vmem:[#allocation2 + $0x128] sm:$0xff] %v1011
        %1076 = vst [vmem:[#allocation2 + $0x130] sm:$0xff] %v1012
        %1077 = vst [vmem:[#allocation2 + $0x138] sm:$0xff] %v1013
        %1078 = vst [vmem:[#allocation2 + $0x140] sm:$0xff] %v1014
        %1079 = vst [vmem:[#allocation2 + $0x148] sm:$0xff] %v1015
        %1080 = vst [vmem:[#allocation2 + $0x150] sm:$0xff] %v1016
        %1081 = vst [vmem:[#allocation2 + $0x158] sm:$0xff] %v1017
        %1082 = vst [vmem:[#allocation2 + $0x160] sm:$0xff] %v1018
        %1083 = vst [vmem:[#allocation2 + $0x168] sm:$0xff] %v1019
        %1084 = vst [vmem:[#allocation2 + $0x170] sm:$0xff] %v1020
        %1085 = vst [vmem:[#allocation2 + $0x178] sm:$0xff] %v1021
        %1086 = vst [vmem:[#allocation2 + $0x180] sm:$0xff] %v1022
        %1087 = vst [vmem:[#allocation2 + $0x188] sm:$0xff] %v1023
        %1088 = vst [vmem:[#allocation2 + $0x190] sm:$0xff] %v1024
        %1089 = vst [vmem:[#allocation2 + $0x198] sm:$0xff] %v1025
        %1090 = vst [vmem:[#allocation2 + $0x1a0] sm:$0xff] %v1026
        %1091 = vst [vmem:[#allocation2 + $0x1a8] sm:$0xff] %v1027
        %1092 = vst [vmem:[#allocation2 + $0x1b0] sm:$0xff] %v1028
        %1093 = vst [vmem:[#allocation2 + $0x1b8] sm:$0xff] %v1029
        %1094 = vst [vmem:[#allocation2 + $0x1c0] sm:$0xff] %v1030
        %1095 = vst [vmem:[#allocation2 + $0x1c8] sm:$0xff] %v1031
        %1096 = vst [vmem:[#allocation2 + $0x1d0] sm:$0xff] %v1032
        %1097 = vst [vmem:[#allocation2 + $0x1d8] sm:$0xff] %v1033
        %1098 = vst [vmem:[#allocation2 + $0x1e0] sm:$0xff] %v1034
        %1099 = vst [vmem:[#allocation2 + $0x1e8] sm:$0xff] %v1035
        %1100 = vst [vmem:[#allocation2 + $0x1f0] sm:$0xff] %v1036
        %1101 = vst [vmem:[#allocation2 + $0x1f8] sm:$0xff] %v1037
        // Predicated region
        $region41: #{tpu_custom_call.1} parent=27 // pred_check
          %p1102 = pneg %p233
        $region42: #{tpu_custom_call.1} parent=27 // pred_check_branch
          %1104 = sbr.rel (%p1102) target = $region44
        $region43: #{tpu_custom_call.1} parent=27 // pred_region
          %v1105 = vld [vmem:[#allocation2] sm:$0xff]
          %v1106 = vld [vmem:[#allocation2 + $0x8] sm:$0xff]
          %v1107 = vld [vmem:[#allocation2 + $0x10] sm:$0xff]
          %v1108 = vld [vmem:[#allocation2 + $0x18] sm:$0xff]
          %v1109 = vld [vmem:[#allocation2 + $0x20] sm:$0xff]
          %v1110 = vld [vmem:[#allocation2 + $0x28] sm:$0xff]
          %v1111 = vld [vmem:[#allocation2 + $0x30] sm:$0xff]
          %v1112 = vld [vmem:[#allocation2 + $0x38] sm:$0xff]
          %v1113 = vld [vmem:[#allocation2 + $0x40] sm:$0xff]
          %v1114 = vld [vmem:[#allocation2 + $0x48] sm:$0xff]
          %v1115 = vld [vmem:[#allocation2 + $0x50] sm:$0xff]
          %v1116 = vld [vmem:[#allocation2 + $0x58] sm:$0xff]
          %v1117 = vld [vmem:[#allocation2 + $0x60] sm:$0xff]
          %v1118 = vld [vmem:[#allocation2 + $0x68] sm:$0xff]
          %v1119 = vld [vmem:[#allocation2 + $0x70] sm:$0xff]
          %v1120 = vld [vmem:[#allocation2 + $0x78] sm:$0xff]
          %v1121 = vld [vmem:[#allocation2 + $0x80] sm:$0xff]
          %v1122 = vld [vmem:[#allocation2 + $0x88] sm:$0xff]
          %v1123 = vld [vmem:[#allocation2 + $0x90] sm:$0xff]
          %v1124 = vld [vmem:[#allocation2 + $0x98] sm:$0xff]
          %v1125 = vld [vmem:[#allocation2 + $0xa0] sm:$0xff]
          %v1126 = vld [vmem:[#allocation2 + $0xa8] sm:$0xff]
          %v1127 = vld [vmem:[#allocation2 + $0xb0] sm:$0xff]
          %v1128 = vld [vmem:[#allocation2 + $0xb8] sm:$0xff]
          %v1129 = vld [vmem:[#allocation2 + $0xc0] sm:$0xff]
          %v1130 = vld [vmem:[#allocation2 + $0xc8] sm:$0xff]
          %v1131 = vld [vmem:[#allocation2 + $0xd0] sm:$0xff]
          %v1132 = vld [vmem:[#allocation2 + $0xd8] sm:$0xff]
          %v1133 = vld [vmem:[#allocation2 + $0xe0] sm:$0xff]
          %v1134 = vld [vmem:[#allocation2 + $0xe8] sm:$0xff]
          %v1135 = vld [vmem:[#allocation2 + $0xf0] sm:$0xff]
          %v1136 = vld [vmem:[#allocation2 + $0xf8] sm:$0xff]
          %v1137 = vld [vmem:[#allocation2 + $0x100] sm:$0xff]
          %v1138 = vld [vmem:[#allocation2 + $0x108] sm:$0xff]
          %v1139 = vld [vmem:[#allocation2 + $0x110] sm:$0xff]
          %v1140 = vld [vmem:[#allocation2 + $0x118] sm:$0xff]
          %v1141 = vld [vmem:[#allocation2 + $0x120] sm:$0xff]
          %v1142 = vld [vmem:[#allocation2 + $0x128] sm:$0xff]
          %v1143 = vld [vmem:[#allocation2 + $0x130] sm:$0xff]
          %v1144 = vld [vmem:[#allocation2 + $0x138] sm:$0xff]
          %v1145 = vld [vmem:[#allocation2 + $0x140] sm:$0xff]
          %v1146 = vld [vmem:[#allocation2 + $0x148] sm:$0xff]
          %v1147 = vld [vmem:[#allocation2 + $0x150] sm:$0xff]
          %v1148 = vld [vmem:[#allocation2 + $0x158] sm:$0xff]
          %v1149 = vld [vmem:[#allocation2 + $0x160] sm:$0xff]
          %v1150 = vld [vmem:[#allocation2 + $0x168] sm:$0xff]
          %v1151 = vld [vmem:[#allocation2 + $0x170] sm:$0xff]
          %v1152 = vld [vmem:[#allocation2 + $0x178] sm:$0xff]
          %v1153 = vld [vmem:[#allocation2 + $0x180] sm:$0xff]
          %v1154 = vld [vmem:[#allocation2 + $0x188] sm:$0xff]
          %v1155 = vld [vmem:[#allocation2 + $0x190] sm:$0xff]
          %v1156 = vld [vmem:[#allocation2 + $0x198] sm:$0xff]
          %v1157 = vld [vmem:[#allocation2 + $0x1a0] sm:$0xff]
          %v1158 = vld [vmem:[#allocation2 + $0x1a8] sm:$0xff]
          %v1159 = vld [vmem:[#allocation2 + $0x1b0] sm:$0xff]
          %v1160 = vld [vmem:[#allocation2 + $0x1b8] sm:$0xff]
          %v1161 = vld [vmem:[#allocation2 + $0x1c0] sm:$0xff]
          %v1162 = vld [vmem:[#allocation2 + $0x1c8] sm:$0xff]
          %v1163 = vld [vmem:[#allocation2 + $0x1d0] sm:$0xff]
          %v1164 = vld [vmem:[#allocation2 + $0x1d8] sm:$0xff]
          %v1165 = vld [vmem:[#allocation2 + $0x1e0] sm:$0xff]
          %v1166 = vld [vmem:[#allocation2 + $0x1e8] sm:$0xff]
          %v1167 = vld [vmem:[#allocation2 + $0x1f0] sm:$0xff]
          %v1168 = vld [vmem:[#allocation2 + $0x1f8] sm:$0xff]
          %v1169 = vpack.c.bf16 %v1106, %v1105
          %v1170 = vpack.c.bf16 %v1108, %v1107
          %v1171 = vpack.c.bf16 %v1110, %v1109
          %v1172 = vpack.c.bf16 %v1112, %v1111
          %v1173 = vpack.c.bf16 %v1114, %v1113
          %v1174 = vpack.c.bf16 %v1116, %v1115
          %v1175 = vpack.c.bf16 %v1118, %v1117
          %v1176 = vpack.c.bf16 %v1120, %v1119
          %v1177 = vpack.c.bf16 %v1122, %v1121
          %v1178 = vpack.c.bf16 %v1124, %v1123
          %v1179 = vpack.c.bf16 %v1126, %v1125
          %v1180 = vpack.c.bf16 %v1128, %v1127
          %v1181 = vpack.c.bf16 %v1130, %v1129
          %v1182 = vpack.c.bf16 %v1132, %v1131
          %v1183 = vpack.c.bf16 %v1134, %v1133
          %v1184 = vpack.c.bf16 %v1136, %v1135
          %v1185 = vpack.c.bf16 %v1138, %v1137
          %v1186 = vpack.c.bf16 %v1140, %v1139
          %v1187 = vpack.c.bf16 %v1142, %v1141
          %v1188 = vpack.c.bf16 %v1144, %v1143
          %v1189 = vpack.c.bf16 %v1146, %v1145
          %v1190 = vpack.c.bf16 %v1148, %v1147
          %v1191 = vpack.c.bf16 %v1150, %v1149
          %v1192 = vpack.c.bf16 %v1152, %v1151
          %v1193 = vpack.c.bf16 %v1154, %v1153
          %v1194 = vpack.c.bf16 %v1156, %v1155
          %v1195 = vpack.c.bf16 %v1158, %v1157
          %v1196 = vpack.c.bf16 %v1160, %v1159
          %v1197 = vpack.c.bf16 %v1162, %v1161
          %v1198 = vpack.c.bf16 %v1164, %v1163
          %v1199 = vpack.c.bf16 %v1166, %v1165
          %v1200 = vpack.c.bf16 %v1168, %v1167
          %v1233 = vunpack.c.l.b16 %v1169
          %v1234 = vunpack.c.h.b16 %v1169
          %v1235 = vunpack.c.l.b16 %v1170
          %v1236 = vunpack.c.h.b16 %v1170
          %v1237 = vunpack.c.l.b16 %v1171
          %v1238 = vunpack.c.h.b16 %v1171
          %v1239 = vunpack.c.l.b16 %v1172
          %v1240 = vunpack.c.h.b16 %v1172
          %v1241 = vunpack.c.l.b16 %v1173
          %v1242 = vunpack.c.h.b16 %v1173
          %v1243 = vunpack.c.l.b16 %v1174
          %v1244 = vunpack.c.h.b16 %v1174
          %v1245 = vunpack.c.l.b16 %v1175
          %v1246 = vunpack.c.h.b16 %v1175
          %v1247 = vunpack.c.l.b16 %v1176
          %v1248 = vunpack.c.h.b16 %v1176
          %v1249 = vunpack.c.l.b16 %v1177
          %v1250 = vunpack.c.h.b16 %v1177
          %v1251 = vunpack.c.l.b16 %v1178
          %v1252 = vunpack.c.h.b16 %v1178
          %v1253 = vunpack.c.l.b16 %v1179
          %v1254 = vunpack.c.h.b16 %v1179
          %v1255 = vunpack.c.l.b16 %v1180
          %v1256 = vunpack.c.h.b16 %v1180
          %v1257 = vunpack.c.l.b16 %v1181
          %v1258 = vunpack.c.h.b16 %v1181
          %v1259 = vunpack.c.l.b16 %v1182
          %v1260 = vunpack.c.h.b16 %v1182
          %v1261 = vunpack.c.l.b16 %v1183
          %v1262 = vunpack.c.h.b16 %v1183
          %v1263 = vunpack.c.l.b16 %v1184
          %v1264 = vunpack.c.h.b16 %v1184
          %v1265 = vunpack.c.l.b16 %v1185
          %v1266 = vunpack.c.h.b16 %v1185
          %v1267 = vunpack.c.l.b16 %v1186
          %v1268 = vunpack.c.h.b16 %v1186
          %v1269 = vunpack.c.l.b16 %v1187
          %v1270 = vunpack.c.h.b16 %v1187
          %v1271 = vunpack.c.l.b16 %v1188
          %v1272 = vunpack.c.h.b16 %v1188
          %v1273 = vunpack.c.l.b16 %v1189
          %v1274 = vunpack.c.h.b16 %v1189
          %v1275 = vunpack.c.l.b16 %v1190
          %v1276 = vunpack.c.h.b16 %v1190
          %v1277 = vunpack.c.l.b16 %v1191
          %v1278 = vunpack.c.h.b16 %v1191
          %v1279 = vunpack.c.l.b16 %v1192
          %v1280 = vunpack.c.h.b16 %v1192
          %v1281 = vunpack.c.l.b16 %v1193
          %v1282 = vunpack.c.h.b16 %v1193
          %v1283 = vunpack.c.l.b16 %v1194
          %v1284 = vunpack.c.h.b16 %v1194
          %v1285 = vunpack.c.l.b16 %v1195
          %v1286 = vunpack.c.h.b16 %v1195
          %v1287 = vunpack.c.l.b16 %v1196
          %v1288 = vunpack.c.h.b16 %v1196
          %v1289 = vunpack.c.l.b16 %v1197
          %v1290 = vunpack.c.h.b16 %v1197
          %v1291 = vunpack.c.l.b16 %v1198
          %v1292 = vunpack.c.h.b16 %v1198
          %v1293 = vunpack.c.l.b16 %v1199
          %v1294 = vunpack.c.h.b16 %v1199
          %v1295 = vunpack.c.l.b16 %v1200
          %v1296 = vunpack.c.h.b16 %v1200
          %v1297 = vpack.c.b16 %v1233, %v1233
          %v1298 = vpack.c.b16 %v1234, %v1234
          %v1299 = vpack.c.b16 %v1235, %v1235
          %v1300 = vpack.c.b16 %v1236, %v1236
          %v1301 = vpack.c.b16 %v1237, %v1237
          %v1302 = vpack.c.b16 %v1238, %v1238
          %v1303 = vpack.c.b16 %v1239, %v1239
          %v1304 = vpack.c.b16 %v1240, %v1240
          %v1305 = vpack.c.b16 %v1241, %v1241
          %v1306 = vpack.c.b16 %v1242, %v1242
          %v1307 = vpack.c.b16 %v1243, %v1243
          %v1308 = vpack.c.b16 %v1244, %v1244
          %v1309 = vpack.c.b16 %v1245, %v1245
          %v1310 = vpack.c.b16 %v1246, %v1246
          %v1311 = vpack.c.b16 %v1247, %v1247
          %v1312 = vpack.c.b16 %v1248, %v1248
          %v1313 = vpack.c.b16 %v1249, %v1249
          %v1314 = vpack.c.b16 %v1250, %v1250
          %v1315 = vpack.c.b16 %v1251, %v1251
          %v1316 = vpack.c.b16 %v1252, %v1252
          %v1317 = vpack.c.b16 %v1253, %v1253
          %v1318 = vpack.c.b16 %v1254, %v1254
          %v1319 = vpack.c.b16 %v1255, %v1255
          %v1320 = vpack.c.b16 %v1256, %v1256
          %v1321 = vpack.c.b16 %v1257, %v1257
          %v1322 = vpack.c.b16 %v1258, %v1258
          %v1323 = vpack.c.b16 %v1259, %v1259
          %v1324 = vpack.c.b16 %v1260, %v1260
          %v1325 = vpack.c.b16 %v1261, %v1261
          %v1326 = vpack.c.b16 %v1262, %v1262
          %v1327 = vpack.c.b16 %v1263, %v1263
          %v1328 = vpack.c.b16 %v1264, %v1264
          %v1329 = vpack.c.b16 %v1265, %v1265
          %v1330 = vpack.c.b16 %v1266, %v1266
          %v1331 = vpack.c.b16 %v1267, %v1267
          %v1332 = vpack.c.b16 %v1268, %v1268
          %v1333 = vpack.c.b16 %v1269, %v1269
          %v1334 = vpack.c.b16 %v1270, %v1270
          %v1335 = vpack.c.b16 %v1271, %v1271
          %v1336 = vpack.c.b16 %v1272, %v1272
          %v1337 = vpack.c.b16 %v1273, %v1273
          %v1338 = vpack.c.b16 %v1274, %v1274
          %v1339 = vpack.c.b16 %v1275, %v1275
          %v1340 = vpack.c.b16 %v1276, %v1276
          %v1341 = vpack.c.b16 %v1277, %v1277
          %v1342 = vpack.c.b16 %v1278, %v1278
          %v1343 = vpack.c.b16 %v1279, %v1279
          %v1344 = vpack.c.b16 %v1280, %v1280
          %v1345 = vpack.c.b16 %v1281, %v1281
          %v1346 = vpack.c.b16 %v1282, %v1282
          %v1347 = vpack.c.b16 %v1283, %v1283
          %v1348 = vpack.c.b16 %v1284, %v1284
          %v1349 = vpack.c.b16 %v1285, %v1285
          %v1350 = vpack.c.b16 %v1286, %v1286
          %v1351 = vpack.c.b16 %v1287, %v1287
          %v1352 = vpack.c.b16 %v1288, %v1288
          %v1353 = vpack.c.b16 %v1289, %v1289
          %v1354 = vpack.c.b16 %v1290, %v1290
          %v1355 = vpack.c.b16 %v1291, %v1291
          %v1356 = vpack.c.b16 %v1292, %v1292
          %v1357 = vpack.c.b16 %v1293, %v1293
          %v1358 = vpack.c.b16 %v1294, %v1294
          %v1359 = vpack.c.b16 %v1295, %v1295
          %v1360 = vpack.c.b16 %v1296, %v1296
          %1425 = vst [vmem:[%s228] sm:$0xf] %v1297
          %1426 = vst [vmem:[%s228 + $0x4] sm:$0xf] %v1298
          %1427 = vst [vmem:[%s228 + $0x8] sm:$0xf] %v1299
          %1428 = vst [vmem:[%s228 + $0xc] sm:$0xf] %v1300
          %1429 = vst [vmem:[%s228 + $0x10] sm:$0xf] %v1301
          %1430 = vst [vmem:[%s228 + $0x14] sm:$0xf] %v1302
          %1431 = vst [vmem:[%s228 + $0x18] sm:$0xf] %v1303
          %1432 = vst [vmem:[%s228 + $0x1c] sm:$0xf] %v1304
          %1433 = vst [vmem:[%s228 + $0x20] sm:$0xf] %v1305
          %1434 = vst [vmem:[%s228 + $0x24] sm:$0xf] %v1306
          %1435 = vst [vmem:[%s228 + $0x28] sm:$0xf] %v1307
          %1436 = vst [vmem:[%s228 + $0x2c] sm:$0xf] %v1308
          %1437 = vst [vmem:[%s228 + $0x30] sm:$0xf] %v1309
          %1438 = vst [vmem:[%s228 + $0x34] sm:$0xf] %v1310
          %1439 = vst [vmem:[%s228 + $0x38] sm:$0xf] %v1311
          %1440 = vst [vmem:[%s228 + $0x3c] sm:$0xf] %v1312
          %1441 = vst [vmem:[%s228 + $0x40] sm:$0xf] %v1313
          %1442 = vst [vmem:[%s228 + $0x44] sm:$0xf] %v1314
          %1443 = vst [vmem:[%s228 + $0x48] sm:$0xf] %v1315
          %1444 = vst [vmem:[%s228 + $0x4c] sm:$0xf] %v1316
          %1445 = vst [vmem:[%s228 + $0x50] sm:$0xf] %v1317
          %1446 = vst [vmem:[%s228 + $0x54] sm:$0xf] %v1318
          %1447 = vst [vmem:[%s228 + $0x58] sm:$0xf] %v1319
          %1448 = vst [vmem:[%s228 + $0x5c] sm:$0xf] %v1320
          %1449 = vst [vmem:[%s228 + $0x60] sm:$0xf] %v1321
          %1450 = vst [vmem:[%s228 + $0x64] sm:$0xf] %v1322
          %1451 = vst [vmem:[%s228 + $0x68] sm:$0xf] %v1323
          %1452 = vst [vmem:[%s228 + $0x6c] sm:$0xf] %v1324
          %1453 = vst [vmem:[%s228 + $0x70] sm:$0xf] %v1325
          %1454 = vst [vmem:[%s228 + $0x74] sm:$0xf] %v1326
          %1455 = vst [vmem:[%s228 + $0x78] sm:$0xf] %v1327
          %1456 = vst [vmem:[%s228 + $0x7c] sm:$0xf] %v1328
          %1457 = vst [vmem:[%s228 + $0x80] sm:$0xf] %v1329
          %1458 = vst [vmem:[%s228 + $0x84] sm:$0xf] %v1330
          %1459 = vst [vmem:[%s228 + $0x88] sm:$0xf] %v1331
          %1460 = vst [vmem:[%s228 + $0x8c] sm:$0xf] %v1332
          %1461 = vst [vmem:[%s228 + $0x90] sm:$0xf] %v1333
          %1462 = vst [vmem:[%s228 + $0x94] sm:$0xf] %v1334
          %1463 = vst [vmem:[%s228 + $0x98] sm:$0xf] %v1335
          %1464 = vst [vmem:[%s228 + $0x9c] sm:$0xf] %v1336
          %1465 = vst [vmem:[%s228 + $0xa0] sm:$0xf] %v1337
          %1466 = vst [vmem:[%s228 + $0xa4] sm:$0xf] %v1338
          %1467 = vst [vmem:[%s228 + $0xa8] sm:$0xf] %v1339
          %1468 = vst [vmem:[%s228 + $0xac] sm:$0xf] %v1340
          %1469 = vst [vmem:[%s228 + $0xb0] sm:$0xf] %v1341
          %1470 = vst [vmem:[%s228 + $0xb4] sm:$0xf] %v1342
          %1471 = vst [vmem:[%s228 + $0xb8] sm:$0xf] %v1343
          %1472 = vst [vmem:[%s228 + $0xbc] sm:$0xf] %v1344
          %1473 = vst [vmem:[%s228 + $0xc0] sm:$0xf] %v1345
          %1474 = vst [vmem:[%s228 + $0xc4] sm:$0xf] %v1346
          %1475 = vst [vmem:[%s228 + $0xc8] sm:$0xf] %v1347
          %1476 = vst [vmem:[%s228 + $0xcc] sm:$0xf] %v1348
          %1477 = vst [vmem:[%s228 + $0xd0] sm:$0xf] %v1349
          %1478 = vst [vmem:[%s228 + $0xd4] sm:$0xf] %v1350
          %1479 = vst [vmem:[%s228 + $0xd8] sm:$0xf] %v1351
          %1480 = vst [vmem:[%s228 + $0xdc] sm:$0xf] %v1352
          %1481 = vst [vmem:[%s228 + $0xe0] sm:$0xf] %v1353
          %1482 = vst [vmem:[%s228 + $0xe4] sm:$0xf] %v1354
          %1483 = vst [vmem:[%s228 + $0xe8] sm:$0xf] %v1355
          %1484 = vst [vmem:[%s228 + $0xec] sm:$0xf] %v1356
          %1485 = vst [vmem:[%s228 + $0xf0] sm:$0xf] %v1357
          %1486 = vst [vmem:[%s228 + $0xf4] sm:$0xf] %v1358
          %1487 = vst [vmem:[%s228 + $0xf8] sm:$0xf] %v1359
          %1488 = vst [vmem:[%s228 + $0xfc] sm:$0xf] %v1360
        $region44: #{tpu_custom_call.1} parent=27 // pred_fallthru
          _
        %s1489 = sand.u32 %s118, 1
        %s1490 = scalar_lea.sflag [#allocation5], %s1489
        %s1491 = sand.u32 %s118, 1
        %s1492 = smul.addr %s1491, 256
        %s1493 = scalar_lea.vmem [#allocation8], %s1492
        // Predicated region
        $region45: #{tpu_custom_call.1} parent=27 // pred_check
          %p1494 = pneg %p128
        $region46: #{tpu_custom_call.1} parent=27 // pred_check_branch
          %1496 = sbr.rel (%p1494) target = $region48
        $region47: #{tpu_custom_call.1} parent=27 // pred_region
          %s1497 = smul.u32 64, %s27
          %s1499 = ssub.s32 4096, 4096
          %1500 = vsyncadd %s1490, %s1499
          %s1501 = sadd.s32 %s28, %s1497
          %s1502 = smul.addr %s26, 1024
          %s1503 = sadd.s32 %s1501, %s1502
          %s1504 = smul.addr %s1503, 64
          %s1505 = scalar_lea.hbm %s2, %s1504
          %s1506 = sshll.u32 %s1493, 4
          %s1507 = int_to_ptr.vmem [resolvable:$true] %s1506
          %1512 = dma.vmem_to_hbm [thread:$0]  %s1507, 4096, %s1505, %s1490, 64, 64, 4
        $region48: #{tpu_custom_call.1} parent=27 // pred_fallthru
          _
      $region28: #{tpu_custom_call.1} parent=5 // pred_fallthru
        _
      %p1513 = scmp.le.s32.totalorder 2, %s15
      // Predicated region
      $region49: #{tpu_custom_call.1} parent=5 // pred_check
        %p1514 = pneg %p1513
      $region50: #{tpu_custom_call.1} parent=5 // pred_check_branch
        %1516 = sbr.rel (%p1514) target = $region52
      $region51: #{tpu_custom_call.1} parent=5 // pred_region
        %s1517 = ssub.s32 %s15, 2
        // Predicated region
        $region53: #{tpu_custom_call.1} parent=51 // pred_check
          %p1518 = pneg %p134
        $region54: #{tpu_custom_call.1} parent=51 // pred_check_branch
          %1520 = sbr.rel (%p1518) target = $region56
        $region55: #{tpu_custom_call.1} parent=51 // pred_region
          %s1521 = sand.u32 %s119, 1
          %s1522 = scalar_lea.sflag [#allocation5], %s1521
          %s1523 = sand.u32 %s119, 1
          %s1524 = smul.addr %s1523, 256
          %s1525 = scalar_lea.vmem [#allocation8], %s1524
          %1526 = dma.done %s1522, 4096
        $region56: #{tpu_custom_call.1} parent=51 // pred_fallthru
          _
      $region52: #{tpu_custom_call.1} parent=5 // pred_fallthru
        _
    $region6: #{tpu_custom_call.1} parent=1 // loop_footer
      %s19 = sadd.s32 1, %s15
    $region7: #{tpu_custom_call.1} parent=1 // loop_footer_branch
      %14 = sbr.rel target = $region3
    $region8: #{tpu_custom_call.1} parent=1 // loop_exit
      _
    %1527 = vsyncpa [#allocation4], 1
    %s1528 = scalar_lea.sflag [#allocation4], 1
    %1529 = vsyncpa %s1528, 1
    %1530 = vsyncpa [#allocation7], 1
    %1531 = vsyncpa [#allocation5], 1
    %s1532 = scalar_lea.sflag [#allocation5], 1
    %1533 = vsyncpa %s1532, 1

</llo_original>
